<compile_context>
chip_gen: v7x
topology: tpu7x:2x2x1
jax: 0.10.0
libtpu: 0.0.40
codegen_flags: <defaults>
</compile_context>

<pallas_src>
import jax
import jax.numpy as jnp
from jax.experimental import pallas as pl
from jax.experimental.pallas import tpu as pltpu


def spatial_attention(x_nchw, conv_w, kernel_size=7):
    """SpatialAttention forward.

    x_nchw : (B, C, H, W) float32
    conv_w : (1, 2, k, k) float32   (PyTorch Conv2d weight, bias=False)
    returns: (B, 1, H, W) float32
    """
    B, C, H, W = x_nchw.shape
    k = kernel_size
    pad = k // 2

    # Pad the raw input spatially once (commutes with the channel mean/max).
    xp = jnp.pad(x_nchw, ((0, 0), (0, 0), (pad, pad), (pad, pad)))
    Hp, Wp = H + 2 * pad, W + 2 * pad

    # Flatten weight to a scalar table: [avg-channel taps (k*k), max-channel taps (k*k)].
    w_flat = conv_w.reshape(2 * k * k).astype(jnp.float32)

    def kernel(w_ref, x_ref, o_ref):
        x = x_ref[0]                                   # (C, Hp, Wp) resident in VMEM
        avg = jnp.mean(x, axis=0)                      # channel mean  (Hp, Wp)
        mx = jnp.max(x, axis=0)                        # channel max   (Hp, Wp)

        acc = jnp.zeros((H, W), jnp.float32)
        # 7x7 conv over the 2-channel [avg; mx] map as unrolled tap accumulation (VPU).
        for dy in range(k):
            for dx in range(k):
                a = avg[dy:dy + H, dx:dx + W]
                m = mx[dy:dy + H, dx:dx + W]
                acc = acc + w_ref[dy * k + dx] * a + w_ref[k * k + dy * k + dx] * m

        # sigmoid (exp on the EUP slot)
        o_ref[0, 0, :, :] = 1.0 / (1.0 + jnp.exp(-acc))

    return pl.pallas_call(
        kernel,
        out_shape=jax.ShapeDtypeStruct((B, 1, H, W), jnp.float32),
        grid=(B,),
        in_specs=[
            pl.BlockSpec(memory_space=pltpu.MemorySpace.SMEM),        # 98 conv weights
            pl.BlockSpec((1, C, Hp, Wp), lambda b: (b, 0, 0, 0)),     # one batch elem/step
        ],
        out_specs=pl.BlockSpec((1, 1, H, W), lambda b: (b, 0, 0, 0)),
        compiler_params=pltpu.CompilerParams(dimension_semantics=("parallel",)),
    )(w_flat, xp)


# ------------------------------------------------------------------ pure-JAX reference
def spatial_attention_ref(x_nchw, conv_w):
    avg = jnp.mean(x_nchw, axis=1, keepdims=True)
    mx = jnp.max(x_nchw, axis=1, keepdims=True)
    cat = jnp.concatenate([avg, mx], axis=1)
    k = conv_w.shape[-1]
    pad = k // 2
    out = jax.lax.conv_general_dilated(
        cat, conv_w, window_strides=(1, 1), padding=[(pad, pad), (pad, pad)],
        dimension_numbers=("NCHW", "OIHW", "NCHW"))
    return jax.nn.sigmoid(out)


if __name__ == "__main__":
    key = jax.random.PRNGKey(0)
    kx, kw = jax.random.split(key)

    B, C, H, W = 2, 4, 16, 16
    K = 7
    x = jax.random.normal(kx, (B, C, H, W), jnp.float32)
    conv_w = jax.random.normal(kw, (1, 2, K, K), jnp.float32) / (2 * K * K) ** 0.5

    fwd = jax.jit(lambda xx, ww: spatial_attention(xx, ww, kernel_size=K))
    out = fwd(x, conv_w)
    jax.block_until_ready(out)

    assert out.shape == (B, 1, H, W), out.shape
    assert bool(jnp.all(jnp.isfinite(out)))

    ref = spatial_attention_ref(x, conv_w)
    assert bool(jnp.allclose(out, ref, rtol=1e-4, atol=1e-5)), \
        float(jnp.max(jnp.abs(out - ref)))

    print("KERNEL_OK")
</pallas_src>

<mosaic_0001>
module attributes {stable_mosaic.version = 11 : i64} {
  func.func @kernel(%arg0: i32, %arg1: memref<98xf32, #tpu.memory_space<smem>>, %arg2: memref<1x4x22x22xf32, #tpu.memory_space<vmem>>, %arg3: memref<1x1x16x16xf32, #tpu.memory_space<vmem>>) attributes {dimension_semantics = [#tpu.dimension_semantics<parallel>], iteration_bounds = array<i64: 2>, scalar_prefetch = 0 : i64, scratch_operands = 0 : i64, tpu.core_type = #tpu.core_type<tc>, window_params = [{transform_indices = @transform_0, window_bounds = array<i64: 98>}, {transform_indices = @transform_1, window_bounds = array<i64: 1, 4, 22, 22>}, {transform_indices = @transform_2, window_bounds = array<i64: 1, 1, 16, 16>}]} {
    %c0 = arith.constant 0 : index
    %c0_0 = arith.constant 0 : index
    %c0_1 = arith.constant 0 : index
    %c0_2 = arith.constant 0 : index
    %0 = vector.load %arg2[%c0, %c0_0, %c0_1, %c0_2] : memref<1x4x22x22xf32, #tpu.memory_space<vmem>>, vector<1x4x22x22xf32>
    %1 = vector.shape_cast %0 : vector<1x4x22x22xf32> to vector<4x22x22xf32>
    %cst = arith.constant dense<0.000000e+00> : vector<22x22xf32>
    %2 = vector.multi_reduction <add>, %1, %cst [0] : vector<4x22x22xf32> to vector<22x22xf32>
    %cst_3 = arith.constant 4.000000e+00 : f32
    %3 = vector.broadcast %cst_3 : f32 to vector<22x22xf32>
    %4 = arith.divf %2, %3 : vector<22x22xf32>
    %cst_4 = arith.constant dense<0xFF800000> : vector<22x22xf32>
    %5 = vector.multi_reduction <maximumf>, %1, %cst_4 [0] : vector<4x22x22xf32> to vector<22x22xf32>
    %cst_5 = arith.constant 0.000000e+00 : f32
    %6 = vector.broadcast %cst_5 : f32 to vector<16x16xf32>
    %7 = vector.extract_strided_slice %4 {offsets = [0, 0], sizes = [16, 16], strides = [1, 1]} : vector<22x22xf32> to vector<16x16xf32>
    %8 = vector.extract_strided_slice %5 {offsets = [0, 0], sizes = [16, 16], strides = [1, 1]} : vector<22x22xf32> to vector<16x16xf32>
    %c0_6 = arith.constant 0 : index
    %9 = memref.load %arg1[%c0_6] : memref<98xf32, #tpu.memory_space<smem>>
    %10 = vector.broadcast %9 : f32 to vector<16x16xf32>
    %11 = arith.mulf %10, %7 : vector<16x16xf32>
    %12 = arith.addf %6, %11 : vector<16x16xf32>
    %c49 = arith.constant 49 : index
    %13 = memref.load %arg1[%c49] : memref<98xf32, #tpu.memory_space<smem>>
    %14 = vector.broadcast %13 : f32 to vector<16x16xf32>
    %15 = arith.mulf %14, %8 : vector<16x16xf32>
    %16 = arith.addf %12, %15 : vector<16x16xf32>
    %17 = vector.extract_strided_slice %4 {offsets = [0, 1], sizes = [16, 16], strides = [1, 1]} : vector<22x22xf32> to vector<16x16xf32>
    %18 = vector.extract_strided_slice %5 {offsets = [0, 1], sizes = [16, 16], strides = [1, 1]} : vector<22x22xf32> to vector<16x16xf32>
    %c1 = arith.constant 1 : index
    %19 = memref.load %arg1[%c1] : memref<98xf32, #tpu.memory_space<smem>>
    %20 = vector.broadcast %19 : f32 to vector<16x16xf32>
    %21 = arith.mulf %20, %17 : vector<16x16xf32>
    %22 = arith.addf %16, %21 : vector<16x16xf32>
    %c50 = arith.constant 50 : index
    %23 = memref.load %arg1[%c50] : memref<98xf32, #tpu.memory_space<smem>>
    %24 = vector.broadcast %23 : f32 to vector<16x16xf32>
    %25 = arith.mulf %24, %18 : vector<16x16xf32>
    %26 = arith.addf %22, %25 : vector<16x16xf32>
    %27 = vector.extract_strided_slice %4 {offsets = [0, 2], sizes = [16, 16], strides = [1, 1]} : vector<22x22xf32> to vector<16x16xf32>
    %28 = vector.extract_strided_slice %5 {offsets = [0, 2], sizes = [16, 16], strides = [1, 1]} : vector<22x22xf32> to vector<16x16xf32>
    %c2 = arith.constant 2 : index
    %29 = memref.load %arg1[%c2] : memref<98xf32, #tpu.memory_space<smem>>
    %30 = vector.broadcast %29 : f32 to vector<16x16xf32>
    %31 = arith.mulf %30, %27 : vector<16x16xf32>
    %32 = arith.addf %26, %31 : vector<16x16xf32>
    %c51 = arith.constant 51 : index
    %33 = memref.load %arg1[%c51] : memref<98xf32, #tpu.memory_space<smem>>
    %34 = vector.broadcast %33 : f32 to vector<16x16xf32>
    %35 = arith.mulf %34, %28 : vector<16x16xf32>
    %36 = arith.addf %32, %35 : vector<16x16xf32>
    %37 = vector.extract_strided_slice %4 {offsets = [0, 3], sizes = [16, 16], strides = [1, 1]} : vector<22x22xf32> to vector<16x16xf32>
    %38 = vector.extract_strided_slice %5 {offsets = [0, 3], sizes = [16, 16], strides = [1, 1]} : vector<22x22xf32> to vector<16x16xf32>
    %c3 = arith.constant 3 : index
    %39 = memref.load %arg1[%c3] : memref<98xf32, #tpu.memory_space<smem>>
    %40 = vector.broadcast %39 : f32 to vector<16x16xf32>
    %41 = arith.mulf %40, %37 : vector<16x16xf32>
    %42 = arith.addf %36, %41 : vector<16x16xf32>
    %c52 = arith.constant 52 : index
    %43 = memref.load %arg1[%c52] : memref<98xf32, #tpu.memory_space<smem>>
    %44 = vector.broadcast %43 : f32 to vector<16x16xf32>
    %45 = arith.mulf %44, %38 : vector<16x16xf32>
    %46 = arith.addf %42, %45 : vector<16x16xf32>
    %47 = vector.extract_strided_slice %4 {offsets = [0, 4], sizes = [16, 16], strides = [1, 1]} : vector<22x22xf32> to vector<16x16xf32>
    %48 = vector.extract_strided_slice %5 {offsets = [0, 4], sizes = [16, 16], strides = [1, 1]} : vector<22x22xf32> to vector<16x16xf32>
    %c4 = arith.constant 4 : index
    %49 = memref.load %arg1[%c4] : memref<98xf32, #tpu.memory_space<smem>>
    %50 = vector.broadcast %49 : f32 to vector<16x16xf32>
    %51 = arith.mulf %50, %47 : vector<16x16xf32>
    %52 = arith.addf %46, %51 : vector<16x16xf32>
    %c53 = arith.constant 53 : index
    %53 = memref.load %arg1[%c53] : memref<98xf32, #tpu.memory_space<smem>>
    %54 = vector.broadcast %53 : f32 to vector<16x16xf32>
    %55 = arith.mulf %54, %48 : vector<16x16xf32>
    %56 = arith.addf %52, %55 : vector<16x16xf32>
    %57 = vector.extract_strided_slice %4 {offsets = [0, 5], sizes = [16, 16], strides = [1, 1]} : vector<22x22xf32> to vector<16x16xf32>
    %58 = vector.extract_strided_slice %5 {offsets = [0, 5], sizes = [16, 16], strides = [1, 1]} : vector<22x22xf32> to vector<16x16xf32>
    %c5 = arith.constant 5 : index
    %59 = memref.load %arg1[%c5] : memref<98xf32, #tpu.memory_space<smem>>
    %60 = vector.broadcast %59 : f32 to vector<16x16xf32>
    %61 = arith.mulf %60, %57 : vector<16x16xf32>
    %62 = arith.addf %56, %61 : vector<16x16xf32>
    %c54 = arith.constant 54 : index
    %63 = memref.load %arg1[%c54] : memref<98xf32, #tpu.memory_space<smem>>
    %64 = vector.broadcast %63 : f32 to vector<16x16xf32>
    %65 = arith.mulf %64, %58 : vector<16x16xf32>
    %66 = arith.addf %62, %65 : vector<16x16xf32>
    %67 = vector.extract_strided_slice %4 {offsets = [0, 6], sizes = [16, 16], strides = [1, 1]} : vector<22x22xf32> to vector<16x16xf32>
    %68 = vector.extract_strided_slice %5 {offsets = [0, 6], sizes = [16, 16], strides = [1, 1]} : vector<22x22xf32> to vector<16x16xf32>
    %c6 = arith.constant 6 : index
    %69 = memref.load %arg1[%c6] : memref<98xf32, #tpu.memory_space<smem>>
    %70 = vector.broadcast %69 : f32 to vector<16x16xf32>
    %71 = arith.mulf %70, %67 : vector<16x16xf32>
    %72 = arith.addf %66, %71 : vector<16x16xf32>
    %c55 = arith.constant 55 : index
    %73 = memref.load %arg1[%c55] : memref<98xf32, #tpu.memory_space<smem>>
    %74 = vector.broadcast %73 : f32 to vector<16x16xf32>
    %75 = arith.mulf %74, %68 : vector<16x16xf32>
    %76 = arith.addf %72, %75 : vector<16x16xf32>
    %77 = vector.extract_strided_slice %4 {offsets = [1, 0], sizes = [16, 16], strides = [1, 1]} : vector<22x22xf32> to vector<16x16xf32>
    %78 = vector.extract_strided_slice %5 {offsets = [1, 0], sizes = [16, 16], strides = [1, 1]} : vector<22x22xf32> to vector<16x16xf32>
    %c7 = arith.constant 7 : index
    %79 = memref.load %arg1[%c7] : memref<98xf32, #tpu.memory_space<smem>>
    %80 = vector.broadcast %79 : f32 to vector<16x16xf32>
    %81 = arith.mulf %80, %77 : vector<16x16xf32>
    %82 = arith.addf %76, %81 : vector<16x16xf32>
    %c56 = arith.constant 56 : index
    %83 = memref.load %arg1[%c56] : memref<98xf32, #tpu.memory_space<smem>>
    %84 = vector.broadcast %83 : f32 to vector<16x16xf32>
    %85 = arith.mulf %84, %78 : vector<16x16xf32>
    %86 = arith.addf %82, %85 : vector<16x16xf32>
    %87 = vector.extract_strided_slice %4 {offsets = [1, 1], sizes = [16, 16], strides = [1, 1]} : vector<22x22xf32> to vector<16x16xf32>
    %88 = vector.extract_strided_slice %5 {offsets = [1, 1], sizes = [16, 16], strides = [1, 1]} : vector<22x22xf32> to vector<16x16xf32>
    %c8 = arith.constant 8 : index
    %89 = memref.load %arg1[%c8] : memref<98xf32, #tpu.memory_space<smem>>
    %90 = vector.broadcast %89 : f32 to vector<16x16xf32>
    %91 = arith.mulf %90, %87 : vector<16x16xf32>
    %92 = arith.addf %86, %91 : vector<16x16xf32>
    %c57 = arith.constant 57 : index
    %93 = memref.load %arg1[%c57] : memref<98xf32, #tpu.memory_space<smem>>
    %94 = vector.broadcast %93 : f32 to vector<16x16xf32>
    %95 = arith.mulf %94, %88 : vector<16x16xf32>
    %96 = arith.addf %92, %95 : vector<16x16xf32>
    %97 = vector.extract_strided_slice %4 {offsets = [1, 2], sizes = [16, 16], strides = [1, 1]} : vector<22x22xf32> to vector<16x16xf32>
    %98 = vector.extract_strided_slice %5 {offsets = [1, 2], sizes = [16, 16], strides = [1, 1]} : vector<22x22xf32> to vector<16x16xf32>
    %c9 = arith.constant 9 : index
    %99 = memref.load %arg1[%c9] : memref<98xf32, #tpu.memory_space<smem>>
    %100 = vector.broadcast %99 : f32 to vector<16x16xf32>
    %101 = arith.mulf %100, %97 : vector<16x16xf32>
    %102 = arith.addf %96, %101 : vector<16x16xf32>
    %c58 = arith.constant 58 : index
    %103 = memref.load %arg1[%c58] : memref<98xf32, #tpu.memory_space<smem>>
    %104 = vector.broadcast %103 : f32 to vector<16x16xf32>
    %105 = arith.mulf %104, %98 : vector<16x16xf32>
    %106 = arith.addf %102, %105 : vector<16x16xf32>
    %107 = vector.extract_strided_slice %4 {offsets = [1, 3], sizes = [16, 16], strides = [1, 1]} : vector<22x22xf32> to vector<16x16xf32>
    %108 = vector.extract_strided_slice %5 {offsets = [1, 3], sizes = [16, 16], strides = [1, 1]} : vector<22x22xf32> to vector<16x16xf32>
    %c10 = arith.constant 10 : index
    %109 = memref.load %arg1[%c10] : memref<98xf32, #tpu.memory_space<smem>>
    %110 = vector.broadcast %109 : f32 to vector<16x16xf32>
    %111 = arith.mulf %110, %107 : vector<16x16xf32>
    %112 = arith.addf %106, %111 : vector<16x16xf32>
    %c59 = arith.constant 59 : index
    %113 = memref.load %arg1[%c59] : memref<98xf32, #tpu.memory_space<smem>>
    %114 = vector.broadcast %113 : f32 to vector<16x16xf32>
    %115 = arith.mulf %114, %108 : vector<16x16xf32>
    %116 = arith.addf %112, %115 : vector<16x16xf32>
    %117 = vector.extract_strided_slice %4 {offsets = [1, 4], sizes = [16, 16], strides = [1, 1]} : vector<22x22xf32> to vector<16x16xf32>
    %118 = vector.extract_strided_slice %5 {offsets = [1, 4], sizes = [16, 16], strides = [1, 1]} : vector<22x22xf32> to vector<16x16xf32>
    %c11 = arith.constant 11 : index
    %119 = memref.load %arg1[%c11] : memref<98xf32, #tpu.memory_space<smem>>
    %120 = vector.broadcast %119 : f32 to vector<16x16xf32>
    %121 = arith.mulf %120, %117 : vector<16x16xf32>
    %122 = arith.addf %116, %121 : vector<16x16xf32>
    %c60 = arith.constant 60 : index
    %123 = memref.load %arg1[%c60] : memref<98xf32, #tpu.memory_space<smem>>
    %124 = vector.broadcast %123 : f32 to vector<16x16xf32>
    %125 = arith.mulf %124, %118 : vector<16x16xf32>
    %126 = arith.addf %122, %125 : vector<16x16xf32>
    %127 = vector.extract_strided_slice %4 {offsets = [1, 5], sizes = [16, 16], strides = [1, 1]} : vector<22x22xf32> to vector<16x16xf32>
    %128 = vector.extract_strided_slice %5 {offsets = [1, 5], sizes = [16, 16], strides = [1, 1]} : vector<22x22xf32> to vector<16x16xf32>
    %c12 = arith.constant 12 : index
    %129 = memref.load %arg1[%c12] : memref<98xf32, #tpu.memory_space<smem>>
    %130 = vector.broadcast %129 : f32 to vector<16x16xf32>
    %131 = arith.mulf %130, %127 : vector<16x16xf32>
    %132 = arith.addf %126, %131 : vector<16x16xf32>
    %c61 = arith.constant 61 : index
    %133 = memref.load %arg1[%c61] : memref<98xf32, #tpu.memory_space<smem>>
    %134 = vector.broadcast %133 : f32 to vector<16x16xf32>
    %135 = arith.mulf %134, %128 : vector<16x16xf32>
    %136 = arith.addf %132, %135 : vector<16x16xf32>
    %137 = vector.extract_strided_slice %4 {offsets = [1, 6], sizes = [16, 16], strides = [1, 1]} : vector<22x22xf32> to vector<16x16xf32>
    %138 = vector.extract_strided_slice %5 {offsets = [1, 6], sizes = [16, 16], strides = [1, 1]} : vector<22x22xf32> to vector<16x16xf32>
    %c13 = arith.constant 13 : index
    %139 = memref.load %arg1[%c13] : memref<98xf32, #tpu.memory_space<smem>>
    %140 = vector.broadcast %139 : f32 to vector<16x16xf32>
    %141 = arith.mulf %140, %137 : vector<16x16xf32>
    %142 = arith.addf %136, %141 : vector<16x16xf32>
    %c62 = arith.constant 62 : index
    %143 = memref.load %arg1[%c62] : memref<98xf32, #tpu.memory_space<smem>>
    %144 = vector.broadcast %143 : f32 to vector<16x16xf32>
    %145 = arith.mulf %144, %138 : vector<16x16xf32>
    %146 = arith.addf %142, %145 : vector<16x16xf32>
    %147 = vector.extract_strided_slice %4 {offsets = [2, 0], sizes = [16, 16], strides = [1, 1]} : vector<22x22xf32> to vector<16x16xf32>
    %148 = vector.extract_strided_slice %5 {offsets = [2, 0], sizes = [16, 16], strides = [1, 1]} : vector<22x22xf32> to vector<16x16xf32>
    %c14 = arith.constant 14 : index
    %149 = memref.load %arg1[%c14] : memref<98xf32, #tpu.memory_space<smem>>
    %150 = vector.broadcast %149 : f32 to vector<16x16xf32>
    %151 = arith.mulf %150, %147 : vector<16x16xf32>
    %152 = arith.addf %146, %151 : vector<16x16xf32>
    %c63 = arith.constant 63 : index
    %153 = memref.load %arg1[%c63] : memref<98xf32, #tpu.memory_space<smem>>
    %154 = vector.broadcast %153 : f32 to vector<16x16xf32>
    %155 = arith.mulf %154, %148 : vector<16x16xf32>
    %156 = arith.addf %152, %155 : vector<16x16xf32>
    %157 = vector.extract_strided_slice %4 {offsets = [2, 1], sizes = [16, 16], strides = [1, 1]} : vector<22x22xf32> to vector<16x16xf32>
    %158 = vector.extract_strided_slice %5 {offsets = [2, 1], sizes = [16, 16], strides = [1, 1]} : vector<22x22xf32> to vector<16x16xf32>
    %c15 = arith.constant 15 : index
    %159 = memref.load %arg1[%c15] : memref<98xf32, #tpu.memory_space<smem>>
    %160 = vector.broadcast %159 : f32 to vector<16x16xf32>
    %161 = arith.mulf %160, %157 : vector<16x16xf32>
    %162 = arith.addf %156, %161 : vector<16x16xf32>
    %c64 = arith.constant 64 : index
    %163 = memref.load %arg1[%c64] : memref<98xf32, #tpu.memory_space<smem>>
    %164 = vector.broadcast %163 : f32 to vector<16x16xf32>
    %165 = arith.mulf %164, %158 : vector<16x16xf32>
    %166 = arith.addf %162, %165 : vector<16x16xf32>
    %167 = vector.extract_strided_slice %4 {offsets = [2, 2], sizes = [16, 16], strides = [1, 1]} : vector<22x22xf32> to vector<16x16xf32>
    %168 = vector.extract_strided_slice %5 {offsets = [2, 2], sizes = [16, 16], strides = [1, 1]} : vector<22x22xf32> to vector<16x16xf32>
    %c16 = arith.constant 16 : index
    %169 = memref.load %arg1[%c16] : memref<98xf32, #tpu.memory_space<smem>>
    %170 = vector.broadcast %169 : f32 to vector<16x16xf32>
    %171 = arith.mulf %170, %167 : vector<16x16xf32>
    %172 = arith.addf %166, %171 : vector<16x16xf32>
    %c65 = arith.constant 65 : index
    %173 = memref.load %arg1[%c65] : memref<98xf32, #tpu.memory_space<smem>>
    %174 = vector.broadcast %173 : f32 to vector<16x16xf32>
    %175 = arith.mulf %174, %168 : vector<16x16xf32>
    %176 = arith.addf %172, %175 : vector<16x16xf32>
    %177 = vector.extract_strided_slice %4 {offsets = [2, 3], sizes = [16, 16], strides = [1, 1]} : vector<22x22xf32> to vector<16x16xf32>
    %178 = vector.extract_strided_slice %5 {offsets = [2, 3], sizes = [16, 16], strides = [1, 1]} : vector<22x22xf32> to vector<16x16xf32>
    %c17 = arith.constant 17 : index
    %179 = memref.load %arg1[%c17] : memref<98xf32, #tpu.memory_space<smem>>
    %180 = vector.broadcast %179 : f32 to vector<16x16xf32>
    %181 = arith.mulf %180, %177 : vector<16x16xf32>
    %182 = arith.addf %176, %181 : vector<16x16xf32>
    %c66 = arith.constant 66 : index
    %183 = memref.load %arg1[%c66] : memref<98xf32, #tpu.memory_space<smem>>
    %184 = vector.broadcast %183 : f32 to vector<16x16xf32>
    %185 = arith.mulf %184, %178 : vector<16x16xf32>
    %186 = arith.addf %182, %185 : vector<16x16xf32>
    %187 = vector.extract_strided_slice %4 {offsets = [2, 4], sizes = [16, 16], strides = [1, 1]} : vector<22x22xf32> to vector<16x16xf32>
    %188 = vector.extract_strided_slice %5 {offsets = [2, 4], sizes = [16, 16], strides = [1, 1]} : vector<22x22xf32> to vector<16x16xf32>
    %c18 = arith.constant 18 : index
    %189 = memref.load %arg1[%c18] : memref<98xf32, #tpu.memory_space<smem>>
    %190 = vector.broadcast %189 : f32 to vector<16x16xf32>
    %191 = arith.mulf %190, %187 : vector<16x16xf32>
    %192 = arith.addf %186, %191 : vector<16x16xf32>
    %c67 = arith.constant 67 : index
    %193 = memref.load %arg1[%c67] : memref<98xf32, #tpu.memory_space<smem>>
    %194 = vector.broadcast %193 : f32 to vector<16x16xf32>
    %195 = arith.mulf %194, %188 : vector<16x16xf32>
    %196 = arith.addf %192, %195 : vector<16x16xf32>
    %197 = vector.extract_strided_slice %4 {offsets = [2, 5], sizes = [16, 16], strides = [1, 1]} : vector<22x22xf32> to vector<16x16xf32>
    %198 = vector.extract_strided_slice %5 {offsets = [2, 5], sizes = [16, 16], strides = [1, 1]} : vector<22x22xf32> to vector<16x16xf32>
    %c19 = arith.constant 19 : index
    %199 = memref.load %arg1[%c19] : memref<98xf32, #tpu.memory_space<smem>>
    %200 = vector.broadcast %199 : f32 to vector<16x16xf32>
    %201 = arith.mulf %200, %197 : vector<16x16xf32>
    %202 = arith.addf %196, %201 : vector<16x16xf32>
    %c68 = arith.constant 68 : index
    %203 = memref.load %arg1[%c68] : memref<98xf32, #tpu.memory_space<smem>>
    %204 = vector.broadcast %203 : f32 to vector<16x16xf32>
    %205 = arith.mulf %204, %198 : vector<16x16xf32>
    %206 = arith.addf %202, %205 : vector<16x16xf32>
    %207 = vector.extract_strided_slice %4 {offsets = [2, 6], sizes = [16, 16], strides = [1, 1]} : vector<22x22xf32> to vector<16x16xf32>
    %208 = vector.extract_strided_slice %5 {offsets = [2, 6], sizes = [16, 16], strides = [1, 1]} : vector<22x22xf32> to vector<16x16xf32>
    %c20 = arith.constant 20 : index
    %209 = memref.load %arg1[%c20] : memref<98xf32, #tpu.memory_space<smem>>
    %210 = vector.broadcast %209 : f32 to vector<16x16xf32>
    %211 = arith.mulf %210, %207 : vector<16x16xf32>
    %212 = arith.addf %206, %211 : vector<16x16xf32>
    %c69 = arith.constant 69 : index
    %213 = memref.load %arg1[%c69] : memref<98xf32, #tpu.memory_space<smem>>
    %214 = vector.broadcast %213 : f32 to vector<16x16xf32>
    %215 = arith.mulf %214, %208 : vector<16x16xf32>
    %216 = arith.addf %212, %215 : vector<16x16xf32>
    %217 = vector.extract_strided_slice %4 {offsets = [3, 0], sizes = [16, 16], strides = [1, 1]} : vector<22x22xf32> to vector<16x16xf32>
    %218 = vector.extract_strided_slice %5 {offsets = [3, 0], sizes = [16, 16], strides = [1, 1]} : vector<22x22xf32> to vector<16x16xf32>
    %c21 = arith.constant 21 : index
    %219 = memref.load %arg1[%c21] : memref<98xf32, #tpu.memory_space<smem>>
    %220 = vector.broadcast %219 : f32 to vector<16x16xf32>
    %221 = arith.mulf %220, %217 : vector<16x16xf32>
    %222 = arith.addf %216, %221 : vector<16x16xf32>
    %c70 = arith.constant 70 : index
    %223 = memref.load %arg1[%c70] : memref<98xf32, #tpu.memory_space<smem>>
    %224 = vector.broadcast %223 : f32 to vector<16x16xf32>
    %225 = arith.mulf %224, %218 : vector<16x16xf32>
    %226 = arith.addf %222, %225 : vector<16x16xf32>
    %227 = vector.extract_strided_slice %4 {offsets = [3, 1], sizes = [16, 16], strides = [1, 1]} : vector<22x22xf32> to vector<16x16xf32>
    %228 = vector.extract_strided_slice %5 {offsets = [3, 1], sizes = [16, 16], strides = [1, 1]} : vector<22x22xf32> to vector<16x16xf32>
    %c22 = arith.constant 22 : index
    %229 = memref.load %arg1[%c22] : memref<98xf32, #tpu.memory_space<smem>>
    %230 = vector.broadcast %229 : f32 to vector<16x16xf32>
    %231 = arith.mulf %230, %227 : vector<16x16xf32>
    %232 = arith.addf %226, %231 : vector<16x16xf32>
    %c71 = arith.constant 71 : index
    %233 = memref.load %arg1[%c71] : memref<98xf32, #tpu.memory_space<smem>>
    %234 = vector.broadcast %233 : f32 to vector<16x16xf32>
    %235 = arith.mulf %234, %228 : vector<16x16xf32>
    %236 = arith.addf %232, %235 : vector<16x16xf32>
    %237 = vector.extract_strided_slice %4 {offsets = [3, 2], sizes = [16, 16], strides = [1, 1]} : vector<22x22xf32> to vector<16x16xf32>
    %238 = vector.extract_strided_slice %5 {offsets = [3, 2], sizes = [16, 16], strides = [1, 1]} : vector<22x22xf32> to vector<16x16xf32>
    %c23 = arith.constant 23 : index
    %239 = memref.load %arg1[%c23] : memref<98xf32, #tpu.memory_space<smem>>
    %240 = vector.broadcast %239 : f32 to vector<16x16xf32>
    %241 = arith.mulf %240, %237 : vector<16x16xf32>
    %242 = arith.addf %236, %241 : vector<16x16xf32>
    %c72 = arith.constant 72 : index
    %243 = memref.load %arg1[%c72] : memref<98xf32, #tpu.memory_space<smem>>
    %244 = vector.broadcast %243 : f32 to vector<16x16xf32>
    %245 = arith.mulf %244, %238 : vector<16x16xf32>
    %246 = arith.addf %242, %245 : vector<16x16xf32>
    %247 = vector.extract_strided_slice %4 {offsets = [3, 3], sizes = [16, 16], strides = [1, 1]} : vector<22x22xf32> to vector<16x16xf32>
    %248 = vector.extract_strided_slice %5 {offsets = [3, 3], sizes = [16, 16], strides = [1, 1]} : vector<22x22xf32> to vector<16x16xf32>
    %c24 = arith.constant 24 : index
    %249 = memref.load %arg1[%c24] : memref<98xf32, #tpu.memory_space<smem>>
    %250 = vector.broadcast %249 : f32 to vector<16x16xf32>
    %251 = arith.mulf %250, %247 : vector<16x16xf32>
    %252 = arith.addf %246, %251 : vector<16x16xf32>
    %c73 = arith.constant 73 : index
    %253 = memref.load %arg1[%c73] : memref<98xf32, #tpu.memory_space<smem>>
    %254 = vector.broadcast %253 : f32 to vector<16x16xf32>
    %255 = arith.mulf %254, %248 : vector<16x16xf32>
    %256 = arith.addf %252, %255 : vector<16x16xf32>
    %257 = vector.extract_strided_slice %4 {offsets = [3, 4], sizes = [16, 16], strides = [1, 1]} : vector<22x22xf32> to vector<16x16xf32>
    %258 = vector.extract_strided_slice %5 {offsets = [3, 4], sizes = [16, 16], strides = [1, 1]} : vector<22x22xf32> to vector<16x16xf32>
    %c25 = arith.constant 25 : index
    %259 = memref.load %arg1[%c25] : memref<98xf32, #tpu.memory_space<smem>>
    %260 = vector.broadcast %259 : f32 to vector<16x16xf32>
    %261 = arith.mulf %260, %257 : vector<16x16xf32>
    %262 = arith.addf %256, %261 : vector<16x16xf32>
    %c74 = arith.constant 74 : index
    %263 = memref.load %arg1[%c74] : memref<98xf32, #tpu.memory_space<smem>>
    %264 = vector.broadcast %263 : f32 to vector<16x16xf32>
    %265 = arith.mulf %264, %258 : vector<16x16xf32>
    %266 = arith.addf %262, %265 : vector<16x16xf32>
    %267 = vector.extract_strided_slice %4 {offsets = [3, 5], sizes = [16, 16], strides = [1, 1]} : vector<22x22xf32> to vector<16x16xf32>
    %268 = vector.extract_strided_slice %5 {offsets = [3, 5], sizes = [16, 16], strides = [1, 1]} : vector<22x22xf32> to vector<16x16xf32>
    %c26 = arith.constant 26 : index
    %269 = memref.load %arg1[%c26] : memref<98xf32, #tpu.memory_space<smem>>
    %270 = vector.broadcast %269 : f32 to vector<16x16xf32>
    %271 = arith.mulf %270, %267 : vector<16x16xf32>
    %272 = arith.addf %266, %271 : vector<16x16xf32>
    %c75 = arith.constant 75 : index
    %273 = memref.load %arg1[%c75] : memref<98xf32, #tpu.memory_space<smem>>
    %274 = vector.broadcast %273 : f32 to vector<16x16xf32>
    %275 = arith.mulf %274, %268 : vector<16x16xf32>
    %276 = arith.addf %272, %275 : vector<16x16xf32>
    %277 = vector.extract_strided_slice %4 {offsets = [3, 6], sizes = [16, 16], strides = [1, 1]} : vector<22x22xf32> to vector<16x16xf32>
    %278 = vector.extract_strided_slice %5 {offsets = [3, 6], sizes = [16, 16], strides = [1, 1]} : vector<22x22xf32> to vector<16x16xf32>
    %c27 = arith.constant 27 : index
    %279 = memref.load %arg1[%c27] : memref<98xf32, #tpu.memory_space<smem>>
    %280 = vector.broadcast %279 : f32 to vector<16x16xf32>
    %281 = arith.mulf %280, %277 : vector<16x16xf32>
    %282 = arith.addf %276, %281 : vector<16x16xf32>
    %c76 = arith.constant 76 : index
    %283 = memref.load %arg1[%c76] : memref<98xf32, #tpu.memory_space<smem>>
    %284 = vector.broadcast %283 : f32 to vector<16x16xf32>
    %285 = arith.mulf %284, %278 : vector<16x16xf32>
    %286 = arith.addf %282, %285 : vector<16x16xf32>
    %287 = vector.extract_strided_slice %4 {offsets = [4, 0], sizes = [16, 16], strides = [1, 1]} : vector<22x22xf32> to vector<16x16xf32>
    %288 = vector.extract_strided_slice %5 {offsets = [4, 0], sizes = [16, 16], strides = [1, 1]} : vector<22x22xf32> to vector<16x16xf32>
    %c28 = arith.constant 28 : index
    %289 = memref.load %arg1[%c28] : memref<98xf32, #tpu.memory_space<smem>>
    %290 = vector.broadcast %289 : f32 to vector<16x16xf32>
    %291 = arith.mulf %290, %287 : vector<16x16xf32>
    %292 = arith.addf %286, %291 : vector<16x16xf32>
    %c77 = arith.constant 77 : index
    %293 = memref.load %arg1[%c77] : memref<98xf32, #tpu.memory_space<smem>>
    %294 = vector.broadcast %293 : f32 to vector<16x16xf32>
    %295 = arith.mulf %294, %288 : vector<16x16xf32>
    %296 = arith.addf %292, %295 : vector<16x16xf32>
    %297 = vector.extract_strided_slice %4 {offsets = [4, 1], sizes = [16, 16], strides = [1, 1]} : vector<22x22xf32> to vector<16x16xf32>
    %298 = vector.extract_strided_slice %5 {offsets = [4, 1], sizes = [16, 16], strides = [1, 1]} : vector<22x22xf32> to vector<16x16xf32>
    %c29 = arith.constant 29 : index
    %299 = memref.load %arg1[%c29] : memref<98xf32, #tpu.memory_space<smem>>
    %300 = vector.broadcast %299 : f32 to vector<16x16xf32>
    %301 = arith.mulf %300, %297 : vector<16x16xf32>
    %302 = arith.addf %296, %301 : vector<16x16xf32>
    %c78 = arith.constant 78 : index
    %303 = memref.load %arg1[%c78] : memref<98xf32, #tpu.memory_space<smem>>
    %304 = vector.broadcast %303 : f32 to vector<16x16xf32>
    %305 = arith.mulf %304, %298 : vector<16x16xf32>
    %306 = arith.addf %302, %305 : vector<16x16xf32>
    %307 = vector.extract_strided_slice %4 {offsets = [4, 2], sizes = [16, 16], strides = [1, 1]} : vector<22x22xf32> to vector<16x16xf32>
    %308 = vector.extract_strided_slice %5 {offsets = [4, 2], sizes = [16, 16], strides = [1, 1]} : vector<22x22xf32> to vector<16x16xf32>
    %c30 = arith.constant 30 : index
    %309 = memref.load %arg1[%c30] : memref<98xf32, #tpu.memory_space<smem>>
    %310 = vector.broadcast %309 : f32 to vector<16x16xf32>
    %311 = arith.mulf %310, %307 : vector<16x16xf32>
    %312 = arith.addf %306, %311 : vector<16x16xf32>
    %c79 = arith.constant 79 : index
    %313 = memref.load %arg1[%c79] : memref<98xf32, #tpu.memory_space<smem>>
    %314 = vector.broadcast %313 : f32 to vector<16x16xf32>
    %315 = arith.mulf %314, %308 : vector<16x16xf32>
    %316 = arith.addf %312, %315 : vector<16x16xf32>
    %317 = vector.extract_strided_slice %4 {offsets = [4, 3], sizes = [16, 16], strides = [1, 1]} : vector<22x22xf32> to vector<16x16xf32>
    %318 = vector.extract_strided_slice %5 {offsets = [4, 3], sizes = [16, 16], strides = [1, 1]} : vector<22x22xf32> to vector<16x16xf32>
    %c31 = arith.constant 31 : index
    %319 = memref.load %arg1[%c31] : memref<98xf32, #tpu.memory_space<smem>>
    %320 = vector.broadcast %319 : f32 to vector<16x16xf32>
    %321 = arith.mulf %320, %317 : vector<16x16xf32>
    %322 = arith.addf %316, %321 : vector<16x16xf32>
    %c80 = arith.constant 80 : index
    %323 = memref.load %arg1[%c80] : memref<98xf32, #tpu.memory_space<smem>>
    %324 = vector.broadcast %323 : f32 to vector<16x16xf32>
    %325 = arith.mulf %324, %318 : vector<16x16xf32>
    %326 = arith.addf %322, %325 : vector<16x16xf32>
    %327 = vector.extract_strided_slice %4 {offsets = [4, 4], sizes = [16, 16], strides = [1, 1]} : vector<22x22xf32> to vector<16x16xf32>
    %328 = vector.extract_strided_slice %5 {offsets = [4, 4], sizes = [16, 16], strides = [1, 1]} : vector<22x22xf32> to vector<16x16xf32>
    %c32 = arith.constant 32 : index
    %329 = memref.load %arg1[%c32] : memref<98xf32, #tpu.memory_space<smem>>
    %330 = vector.broadcast %329 : f32 to vector<16x16xf32>
    %331 = arith.mulf %330, %327 : vector<16x16xf32>
    %332 = arith.addf %326, %331 : vector<16x16xf32>
    %c81 = arith.constant 81 : index
    %333 = memref.load %arg1[%c81] : memref<98xf32, #tpu.memory_space<smem>>
    %334 = vector.broadcast %333 : f32 to vector<16x16xf32>
    %335 = arith.mulf %334, %328 : vector<16x16xf32>
    %336 = arith.addf %332, %335 : vector<16x16xf32>
    %337 = vector.extract_strided_slice %4 {offsets = [4, 5], sizes = [16, 16], strides = [1, 1]} : vector<22x22xf32> to vector<16x16xf32>
    %338 = vector.extract_strided_slice %5 {offsets = [4, 5], sizes = [16, 16], strides = [1, 1]} : vector<22x22xf32> to vector<16x16xf32>
    %c33 = arith.constant 33 : index
    %339 = memref.load %arg1[%c33] : memref<98xf32, #tpu.memory_space<smem>>
    %340 = vector.broadcast %339 : f32 to vector<16x16xf32>
    %341 = arith.mulf %340, %337 : vector<16x16xf32>
    %342 = arith.addf %336, %341 : vector<16x16xf32>
    %c82 = arith.constant 82 : index
    %343 = memref.load %arg1[%c82] : memref<98xf32, #tpu.memory_space<smem>>
    %344 = vector.broadcast %343 : f32 to vector<16x16xf32>
    %345 = arith.mulf %344, %338 : vector<16x16xf32>
    %346 = arith.addf %342, %345 : vector<16x16xf32>
    %347 = vector.extract_strided_slice %4 {offsets = [4, 6], sizes = [16, 16], strides = [1, 1]} : vector<22x22xf32> to vector<16x16xf32>
    %348 = vector.extract_strided_slice %5 {offsets = [4, 6], sizes = [16, 16], strides = [1, 1]} : vector<22x22xf32> to vector<16x16xf32>
    %c34 = arith.constant 34 : index
    %349 = memref.load %arg1[%c34] : memref<98xf32, #tpu.memory_space<smem>>
    %350 = vector.broadcast %349 : f32 to vector<16x16xf32>
    %351 = arith.mulf %350, %347 : vector<16x16xf32>
    %352 = arith.addf %346, %351 : vector<16x16xf32>
    %c83 = arith.constant 83 : index
    %353 = memref.load %arg1[%c83] : memref<98xf32, #tpu.memory_space<smem>>
    %354 = vector.broadcast %353 : f32 to vector<16x16xf32>
    %355 = arith.mulf %354, %348 : vector<16x16xf32>
    %356 = arith.addf %352, %355 : vector<16x16xf32>
    %357 = vector.extract_strided_slice %4 {offsets = [5, 0], sizes = [16, 16], strides = [1, 1]} : vector<22x22xf32> to vector<16x16xf32>
    %358 = vector.extract_strided_slice %5 {offsets = [5, 0], sizes = [16, 16], strides = [1, 1]} : vector<22x22xf32> to vector<16x16xf32>
    %c35 = arith.constant 35 : index
    %359 = memref.load %arg1[%c35] : memref<98xf32, #tpu.memory_space<smem>>
    %360 = vector.broadcast %359 : f32 to vector<16x16xf32>
    %361 = arith.mulf %360, %357 : vector<16x16xf32>
    %362 = arith.addf %356, %361 : vector<16x16xf32>
    %c84 = arith.constant 84 : index
    %363 = memref.load %arg1[%c84] : memref<98xf32, #tpu.memory_space<smem>>
    %364 = vector.broadcast %363 : f32 to vector<16x16xf32>
    %365 = arith.mulf %364, %358 : vector<16x16xf32>
    %366 = arith.addf %362, %365 : vector<16x16xf32>
    %367 = vector.extract_strided_slice %4 {offsets = [5, 1], sizes = [16, 16], strides = [1, 1]} : vector<22x22xf32> to vector<16x16xf32>
    %368 = vector.extract_strided_slice %5 {offsets = [5, 1], sizes = [16, 16], strides = [1, 1]} : vector<22x22xf32> to vector<16x16xf32>
    %c36 = arith.constant 36 : index
    %369 = memref.load %arg1[%c36] : memref<98xf32, #tpu.memory_space<smem>>
    %370 = vector.broadcast %369 : f32 to vector<16x16xf32>
    %371 = arith.mulf %370, %367 : vector<16x16xf32>
    %372 = arith.addf %366, %371 : vector<16x16xf32>
    %c85 = arith.constant 85 : index
    %373 = memref.load %arg1[%c85] : memref<98xf32, #tpu.memory_space<smem>>
    %374 = vector.broadcast %373 : f32 to vector<16x16xf32>
    %375 = arith.mulf %374, %368 : vector<16x16xf32>
    %376 = arith.addf %372, %375 : vector<16x16xf32>
    %377 = vector.extract_strided_slice %4 {offsets = [5, 2], sizes = [16, 16], strides = [1, 1]} : vector<22x22xf32> to vector<16x16xf32>
    %378 = vector.extract_strided_slice %5 {offsets = [5, 2], sizes = [16, 16], strides = [1, 1]} : vector<22x22xf32> to vector<16x16xf32>
    %c37 = arith.constant 37 : index
    %379 = memref.load %arg1[%c37] : memref<98xf32, #tpu.memory_space<smem>>
    %380 = vector.broadcast %379 : f32 to vector<16x16xf32>
    %381 = arith.mulf %380, %377 : vector<16x16xf32>
    %382 = arith.addf %376, %381 : vector<16x16xf32>
    %c86 = arith.constant 86 : index
    %383 = memref.load %arg1[%c86] : memref<98xf32, #tpu.memory_space<smem>>
    %384 = vector.broadcast %383 : f32 to vector<16x16xf32>
    %385 = arith.mulf %384, %378 : vector<16x16xf32>
    %386 = arith.addf %382, %385 : vector<16x16xf32>
    %387 = vector.extract_strided_slice %4 {offsets = [5, 3], sizes = [16, 16], strides = [1, 1]} : vector<22x22xf32> to vector<16x16xf32>
    %388 = vector.extract_strided_slice %5 {offsets = [5, 3], sizes = [16, 16], strides = [1, 1]} : vector<22x22xf32> to vector<16x16xf32>
    %c38 = arith.constant 38 : index
    %389 = memref.load %arg1[%c38] : memref<98xf32, #tpu.memory_space<smem>>
    %390 = vector.broadcast %389 : f32 to vector<16x16xf32>
    %391 = arith.mulf %390, %387 : vector<16x16xf32>
    %392 = arith.addf %386, %391 : vector<16x16xf32>
    %c87 = arith.constant 87 : index
    %393 = memref.load %arg1[%c87] : memref<98xf32, #tpu.memory_space<smem>>
    %394 = vector.broadcast %393 : f32 to vector<16x16xf32>
    %395 = arith.mulf %394, %388 : vector<16x16xf32>
    %396 = arith.addf %392, %395 : vector<16x16xf32>
    %397 = vector.extract_strided_slice %4 {offsets = [5, 4], sizes = [16, 16], strides = [1, 1]} : vector<22x22xf32> to vector<16x16xf32>
    %398 = vector.extract_strided_slice %5 {offsets = [5, 4], sizes = [16, 16], strides = [1, 1]} : vector<22x22xf32> to vector<16x16xf32>
    %c39 = arith.constant 39 : index
    %399 = memref.load %arg1[%c39] : memref<98xf32, #tpu.memory_space<smem>>
    %400 = vector.broadcast %399 : f32 to vector<16x16xf32>
    %401 = arith.mulf %400, %397 : vector<16x16xf32>
    %402 = arith.addf %396, %401 : vector<16x16xf32>
    %c88 = arith.constant 88 : index
    %403 = memref.load %arg1[%c88] : memref<98xf32, #tpu.memory_space<smem>>
    %404 = vector.broadcast %403 : f32 to vector<16x16xf32>
    %405 = arith.mulf %404, %398 : vector<16x16xf32>
    %406 = arith.addf %402, %405 : vector<16x16xf32>
    %407 = vector.extract_strided_slice %4 {offsets = [5, 5], sizes = [16, 16], strides = [1, 1]} : vector<22x22xf32> to vector<16x16xf32>
    %408 = vector.extract_strided_slice %5 {offsets = [5, 5], sizes = [16, 16], strides = [1, 1]} : vector<22x22xf32> to vector<16x16xf32>
    %c40 = arith.constant 40 : index
    %409 = memref.load %arg1[%c40] : memref<98xf32, #tpu.memory_space<smem>>
    %410 = vector.broadcast %409 : f32 to vector<16x16xf32>
    %411 = arith.mulf %410, %407 : vector<16x16xf32>
    %412 = arith.addf %406, %411 : vector<16x16xf32>
    %c89 = arith.constant 89 : index
    %413 = memref.load %arg1[%c89] : memref<98xf32, #tpu.memory_space<smem>>
    %414 = vector.broadcast %413 : f32 to vector<16x16xf32>
    %415 = arith.mulf %414, %408 : vector<16x16xf32>
    %416 = arith.addf %412, %415 : vector<16x16xf32>
    %417 = vector.extract_strided_slice %4 {offsets = [5, 6], sizes = [16, 16], strides = [1, 1]} : vector<22x22xf32> to vector<16x16xf32>
    %418 = vector.extract_strided_slice %5 {offsets = [5, 6], sizes = [16, 16], strides = [1, 1]} : vector<22x22xf32> to vector<16x16xf32>
    %c41 = arith.constant 41 : index
    %419 = memref.load %arg1[%c41] : memref<98xf32, #tpu.memory_space<smem>>
    %420 = vector.broadcast %419 : f32 to vector<16x16xf32>
    %421 = arith.mulf %420, %417 : vector<16x16xf32>
    %422 = arith.addf %416, %421 : vector<16x16xf32>
    %c90 = arith.constant 90 : index
    %423 = memref.load %arg1[%c90] : memref<98xf32, #tpu.memory_space<smem>>
    %424 = vector.broadcast %423 : f32 to vector<16x16xf32>
    %425 = arith.mulf %424, %418 : vector<16x16xf32>
    %426 = arith.addf %422, %425 : vector<16x16xf32>
    %427 = vector.extract_strided_slice %4 {offsets = [6, 0], sizes = [16, 16], strides = [1, 1]} : vector<22x22xf32> to vector<16x16xf32>
    %428 = vector.extract_strided_slice %5 {offsets = [6, 0], sizes = [16, 16], strides = [1, 1]} : vector<22x22xf32> to vector<16x16xf32>
    %c42 = arith.constant 42 : index
    %429 = memref.load %arg1[%c42] : memref<98xf32, #tpu.memory_space<smem>>
    %430 = vector.broadcast %429 : f32 to vector<16x16xf32>
    %431 = arith.mulf %430, %427 : vector<16x16xf32>
    %432 = arith.addf %426, %431 : vector<16x16xf32>
    %c91 = arith.constant 91 : index
    %433 = memref.load %arg1[%c91] : memref<98xf32, #tpu.memory_space<smem>>
    %434 = vector.broadcast %433 : f32 to vector<16x16xf32>
    %435 = arith.mulf %434, %428 : vector<16x16xf32>
    %436 = arith.addf %432, %435 : vector<16x16xf32>
    %437 = vector.extract_strided_slice %4 {offsets = [6, 1], sizes = [16, 16], strides = [1, 1]} : vector<22x22xf32> to vector<16x16xf32>
    %438 = vector.extract_strided_slice %5 {offsets = [6, 1], sizes = [16, 16], strides = [1, 1]} : vector<22x22xf32> to vector<16x16xf32>
    %c43 = arith.constant 43 : index
    %439 = memref.load %arg1[%c43] : memref<98xf32, #tpu.memory_space<smem>>
    %440 = vector.broadcast %439 : f32 to vector<16x16xf32>
    %441 = arith.mulf %440, %437 : vector<16x16xf32>
    %442 = arith.addf %436, %441 : vector<16x16xf32>
    %c92 = arith.constant 92 : index
    %443 = memref.load %arg1[%c92] : memref<98xf32, #tpu.memory_space<smem>>
    %444 = vector.broadcast %443 : f32 to vector<16x16xf32>
    %445 = arith.mulf %444, %438 : vector<16x16xf32>
    %446 = arith.addf %442, %445 : vector<16x16xf32>
    %447 = vector.extract_strided_slice %4 {offsets = [6, 2], sizes = [16, 16], strides = [1, 1]} : vector<22x22xf32> to vector<16x16xf32>
    %448 = vector.extract_strided_slice %5 {offsets = [6, 2], sizes = [16, 16], strides = [1, 1]} : vector<22x22xf32> to vector<16x16xf32>
    %c44 = arith.constant 44 : index
    %449 = memref.load %arg1[%c44] : memref<98xf32, #tpu.memory_space<smem>>
    %450 = vector.broadcast %449 : f32 to vector<16x16xf32>
    %451 = arith.mulf %450, %447 : vector<16x16xf32>
    %452 = arith.addf %446, %451 : vector<16x16xf32>
    %c93 = arith.constant 93 : index
    %453 = memref.load %arg1[%c93] : memref<98xf32, #tpu.memory_space<smem>>
    %454 = vector.broadcast %453 : f32 to vector<16x16xf32>
    %455 = arith.mulf %454, %448 : vector<16x16xf32>
    %456 = arith.addf %452, %455 : vector<16x16xf32>
    %457 = vector.extract_strided_slice %4 {offsets = [6, 3], sizes = [16, 16], strides = [1, 1]} : vector<22x22xf32> to vector<16x16xf32>
    %458 = vector.extract_strided_slice %5 {offsets = [6, 3], sizes = [16, 16], strides = [1, 1]} : vector<22x22xf32> to vector<16x16xf32>
    %c45 = arith.constant 45 : index
    %459 = memref.load %arg1[%c45] : memref<98xf32, #tpu.memory_space<smem>>
    %460 = vector.broadcast %459 : f32 to vector<16x16xf32>
    %461 = arith.mulf %460, %457 : vector<16x16xf32>
    %462 = arith.addf %456, %461 : vector<16x16xf32>
    %c94 = arith.constant 94 : index
    %463 = memref.load %arg1[%c94] : memref<98xf32, #tpu.memory_space<smem>>
    %464 = vector.broadcast %463 : f32 to vector<16x16xf32>
    %465 = arith.mulf %464, %458 : vector<16x16xf32>
    %466 = arith.addf %462, %465 : vector<16x16xf32>
    %467 = vector.extract_strided_slice %4 {offsets = [6, 4], sizes = [16, 16], strides = [1, 1]} : vector<22x22xf32> to vector<16x16xf32>
    %468 = vector.extract_strided_slice %5 {offsets = [6, 4], sizes = [16, 16], strides = [1, 1]} : vector<22x22xf32> to vector<16x16xf32>
    %c46 = arith.constant 46 : index
    %469 = memref.load %arg1[%c46] : memref<98xf32, #tpu.memory_space<smem>>
    %470 = vector.broadcast %469 : f32 to vector<16x16xf32>
    %471 = arith.mulf %470, %467 : vector<16x16xf32>
    %472 = arith.addf %466, %471 : vector<16x16xf32>
    %c95 = arith.constant 95 : index
    %473 = memref.load %arg1[%c95] : memref<98xf32, #tpu.memory_space<smem>>
    %474 = vector.broadcast %473 : f32 to vector<16x16xf32>
    %475 = arith.mulf %474, %468 : vector<16x16xf32>
    %476 = arith.addf %472, %475 : vector<16x16xf32>
    %477 = vector.extract_strided_slice %4 {offsets = [6, 5], sizes = [16, 16], strides = [1, 1]} : vector<22x22xf32> to vector<16x16xf32>
    %478 = vector.extract_strided_slice %5 {offsets = [6, 5], sizes = [16, 16], strides = [1, 1]} : vector<22x22xf32> to vector<16x16xf32>
    %c47 = arith.constant 47 : index
    %479 = memref.load %arg1[%c47] : memref<98xf32, #tpu.memory_space<smem>>
    %480 = vector.broadcast %479 : f32 to vector<16x16xf32>
    %481 = arith.mulf %480, %477 : vector<16x16xf32>
    %482 = arith.addf %476, %481 : vector<16x16xf32>
    %c96 = arith.constant 96 : index
    %483 = memref.load %arg1[%c96] : memref<98xf32, #tpu.memory_space<smem>>
    %484 = vector.broadcast %483 : f32 to vector<16x16xf32>
    %485 = arith.mulf %484, %478 : vector<16x16xf32>
    %486 = arith.addf %482, %485 : vector<16x16xf32>
    %487 = vector.extract_strided_slice %4 {offsets = [6, 6], sizes = [16, 16], strides = [1, 1]} : vector<22x22xf32> to vector<16x16xf32>
    %488 = vector.extract_strided_slice %5 {offsets = [6, 6], sizes = [16, 16], strides = [1, 1]} : vector<22x22xf32> to vector<16x16xf32>
    %c48 = arith.constant 48 : index
    %489 = memref.load %arg1[%c48] : memref<98xf32, #tpu.memory_space<smem>>
    %490 = vector.broadcast %489 : f32 to vector<16x16xf32>
    %491 = arith.mulf %490, %487 : vector<16x16xf32>
    %492 = arith.addf %486, %491 : vector<16x16xf32>
    %c97 = arith.constant 97 : index
    %493 = memref.load %arg1[%c97] : memref<98xf32, #tpu.memory_space<smem>>
    %494 = vector.broadcast %493 : f32 to vector<16x16xf32>
    %495 = arith.mulf %494, %488 : vector<16x16xf32>
    %496 = arith.addf %492, %495 : vector<16x16xf32>
    %cst_7 = arith.constant 0.000000e+00 : f32
    %497 = vector.broadcast %cst_7 : f32 to vector<16x16xf32>
    %498 = arith.subf %497, %496 : vector<16x16xf32>
    %499 = math.exp %498 : vector<16x16xf32>
    %cst_8 = arith.constant 1.000000e+00 : f32
    %500 = vector.broadcast %cst_8 : f32 to vector<16x16xf32>
    %501 = arith.addf %500, %499 : vector<16x16xf32>
    %cst_9 = arith.constant 1.000000e+00 : f32
    %502 = vector.broadcast %cst_9 : f32 to vector<16x16xf32>
    %503 = arith.divf %502, %501 : vector<16x16xf32>
    %c0_10 = arith.constant 0 : index
    %c0_11 = arith.constant 0 : index
    %c0_12 = arith.constant 0 : index
    %c0_13 = arith.constant 0 : index
    %504 = vector.load %arg3[%c0_10, %c0_11, %c0_12, %c0_13] : memref<1x1x16x16xf32, #tpu.memory_space<vmem>>, vector<1x1x16x16xf32>
    %505 = vector.shape_cast %504 : vector<1x1x16x16xf32> to vector<16x16xf32>
    %506 = vector.shape_cast %503 : vector<16x16xf32> to vector<1x1x16x16xf32>
    tpu.vector_store %arg3[%c0_10, %c0_11, %c0_12, %c0_13], %506 {strides = array<i32>} : memref<1x1x16x16xf32, #tpu.memory_space<vmem>>, vector<1x1x16x16xf32>,
    return
  }
  func.func @transform_0(%arg0: i32) -> i32 {
    %c0_i32 = arith.constant 0 : i32
    %c0_i32_0 = arith.constant 0 : i32
    return %c0_i32 : i32
  }
  func.func @transform_1(%arg0: i32) -> (i32, i32, i32, i32) {
    %c0_i32 = arith.constant 0 : i32
    %c0_i32_0 = arith.constant 0 : i32
    %c0_i32_1 = arith.constant 0 : i32
    %c0_i32_2 = arith.constant 0 : i32
    return %arg0, %c0_i32, %c0_i32_0, %c0_i32_1 : i32, i32, i32, i32
  }
  func.func @transform_2(%arg0: i32) -> (i32, i32, i32, i32) {
    %c0_i32 = arith.constant 0 : i32
    %c0_i32_0 = arith.constant 0 : i32
    %c0_i32_1 = arith.constant 0 : i32
    %c0_i32_2 = arith.constant 0 : i32
    return %arg0, %c0_i32, %c0_i32_0, %c0_i32_1 : i32, i32, i32, i32
  }
}

</mosaic_0001>

<llo_original>
// kernel: _lambda_.1
$region0: #{_lambda_.1}
  #allocation0 [shape = 'u32[]', space=smem, size = 0x4, offset = 0x4, fixed_abs, tag = 'smem constant byte address 0x4 - core index']
  #allocation1 [shape = 'u32[144,128]{1,0:T(1,128)}', space=vmem, size = 0x12000, scoped, tag = 'internal scratch']
  %s0 = inlined_call_operand.vmem [shape: f32[98], index: 0, kind: input, shape index: {}]
  %s1 = inlined_call_operand.vmem [shape: f32[2,4,22,22], index: 1, kind: input, shape index: {}]
  %s2 = inlined_call_operand.hbm [shape: f32[2,1,16,16], index: 2, kind: output, shape index: {}]
  %s3 = sld [smem:[#allocation0]]
  $region45: #{_lambda_.1} parent=0
    _
  %s5 = ssub.s32 1, %s3
  %s6 = scalar_select 0, %s5, %s3
  $region1: #{_lambda_.1} parent=0
    #allocation2 [shape = 'u8[512]{0}', space=smem, size = 0x200, scoped, tag = 'input window, operand 0, single buffered']
    #allocation3 [shape = 's32[2]{0}', space=sflag, size = 0x8, scoped, tag = 'scoped memory for _lambda_.1']
    #allocation4 [shape = 's32[2]{0}', space=sflag, size = 0x8, scoped, tag = 'scoped memory for _lambda_.1']
    #allocation5 [shape = 'u8[16384]{0}', space=vmem, size = 0x4000, scoped, tag = 'output window, operand 0']
    %7 = vsyncpa [#allocation4], 0
    %8 = vsyncpa [#allocation3], 0
    %s9 = scalar_lea.sflag [#allocation3], 1
    %10 = vsyncpa %s9, 0
    loop: start=0, step=1, limit=4
    $region2: #{_lambda_.1} parent=1 // loop_pre_header
      _
    $region3: #{_lambda_.1} parent=1 // loop_header
      %s12 = sphi 0, %s16
      %p13 = scmp.ge.s32.totalorder %s12, 4
      %s20 = sphi 0, %s20
      %s22 = sphi 0, %s20
      %s23 = sphi 0, %s22
      %s37 = sphi 0, %s23
      %s43 = sphi 0, %s45
      %s46 = sphi 0, %s43
      %s47 = sphi 0, %s46
      %s63 = sphi 0, %s47
      %s69 = sphi 0, %s71
      %s72 = sphi 0, %s69
      %s73 = sphi 0, %s72
      %s89 = sphi 0, %s73
    $region4: #{_lambda_.1} parent=1 // loop_header_branch
      %15 = sbr.rel (%p13) target = $region8
    $region5: #{_lambda_.1} parent=1 // loop_body
      %s17 = ssub.s32 %s12, 1
      %s18 = ssub.s32 %s12, 2
      %s19 = sadd.s32 %s12, 1
      %s21 = sadd.s32 %s20, 1
      %p24 = scmp.eq.s32.totalorder %s12, 1
      %p25 = scmp.ne.s32.totalorder %s20, %s22
      %p26 = scmp.eq.s32.totalorder %s12, 0
      %p27 = por %p25, %p26
      %p28 = scmp.ne.s32.totalorder %s20, %s22
      %p29 = scmp.eq.s32.totalorder %s17, 1
      %p30 = por %p28, %p29
      %p31 = scmp.ne.s32.totalorder %s22, %s23
      %p32 = scmp.eq.s32.totalorder %s17, 0
      %p33 = por %p31, %p32
      %p34 = scmp.ne.s32.totalorder %s22, %s23
      %p35 = scmp.eq.s32.totalorder %s18, 1
      %p36 = por %p34, %p35
      %p38 = scmp.ne.s32.totalorder %s23, %s37
      %p39 = scmp.eq.s32.totalorder %s18, 0
      %p40 = por %p38, %p39
      %s41 = ssub.s32 %s12, %s19
      %p42 = scmp.eq.s32.totalorder %s41, 0
      %s44 = sadd.s32 %s43, 1
      %s45 = scalar_select %p42, %s43, %s44
      %p48 = pneg %p42
      %p49 = scmp.eq.s32.totalorder %s12, 1
      %p50 = por %p48, %p49
      %p51 = scmp.ne.s32.totalorder %s43, %s46
      %p52 = scmp.eq.s32.totalorder %s12, 0
      %p53 = por %p51, %p52
      %p54 = scmp.ne.s32.totalorder %s43, %s46
      %p55 = scmp.eq.s32.totalorder %s17, 1
      %p56 = por %p54, %p55
      %p57 = scmp.ne.s32.totalorder %s46, %s47
      %p58 = scmp.eq.s32.totalorder %s17, 0
      %p59 = por %p57, %p58
      %p60 = scmp.ne.s32.totalorder %s46, %s47
      %p61 = scmp.eq.s32.totalorder %s18, 1
      %p62 = por %p60, %p61
      %p64 = scmp.ne.s32.totalorder %s47, %s63
      %p65 = scmp.eq.s32.totalorder %s18, 0
      %p66 = por %p64, %p65
      %s67 = ssub.s32 %s12, %s19
      %p68 = scmp.eq.s32.totalorder %s67, 0
      %s70 = sadd.s32 %s69, 1
      %s71 = scalar_select %p68, %s69, %s70
      %p74 = pneg %p68
      %p75 = scmp.eq.s32.totalorder %s12, 1
      %p76 = por %p74, %p75
      %p77 = scmp.ne.s32.totalorder %s69, %s72
      %p78 = scmp.eq.s32.totalorder %s12, 0
      %p79 = por %p77, %p78
      %p80 = scmp.ne.s32.totalorder %s69, %s72
      %p81 = scmp.eq.s32.totalorder %s17, 1
      %p82 = por %p80, %p81
      %p83 = scmp.ne.s32.totalorder %s72, %s73
      %p84 = scmp.eq.s32.totalorder %s17, 0
      %p85 = por %p83, %p84
      %p86 = scmp.ne.s32.totalorder %s72, %s73
      %p87 = scmp.eq.s32.totalorder %s18, 1
      %p88 = por %p86, %p87
      %p90 = scmp.ne.s32.totalorder %s73, %s89
      %p91 = scmp.eq.s32.totalorder %s18, 0
      %p92 = por %p90, %p91
      %p93 = scmp.le.s32.totalorder 1, %s12
      %p94 = scmp.lt.s32.totalorder %s12, 3
      %p95 = pnand %p93, %p94
      %p96 = pneg %p95
      // Predicated region
      $region9: #{_lambda_.1} parent=5 // pred_check
        _
      $region10: #{_lambda_.1} parent=5 // pred_check_branch
        %98 = sbr.rel (%p95) target = $region12
      $region11: #{_lambda_.1} parent=5 // pred_region
        %s99 = ssub.s32 %s12, 1
        // Predicated region
        $region13: #{_lambda_.1} parent=11 // pred_check
          %p100 = pneg %p33
        $region14: #{_lambda_.1} parent=11 // pred_check_branch
          %102 = sbr.rel (%p100) target = $region16
        $region15: #{_lambda_.1} parent=11 // pred_region
          %s104 = ssub.s32 16, 16
          %105 = vsyncadd [#allocation4], %s104
          %s107 = sshll.u32 %s0, 4
          %s108 = int_to_ptr.vmem [resolvable:$true] %s107
          %110 = dma.vmem_to_smem %s108, 16, [#allocation2], [#allocation4]
        $region16: #{_lambda_.1} parent=11 // pred_fallthru
          _
      $region12: #{_lambda_.1} parent=5 // pred_fallthru
        _
      %p111 = scmp.lt.s32.totalorder %s12, 2
      // Predicated region
      $region17: #{_lambda_.1} parent=5 // pred_check
        %p112 = pneg %p111
      $region18: #{_lambda_.1} parent=5 // pred_check_branch
        %114 = sbr.rel (%p112) target = $region20
      $region19: #{_lambda_.1} parent=5 // pred_region
        // Predicated region
        $region21: #{_lambda_.1} parent=19 // pred_check
          %p115 = pneg %p53
        $region22: #{_lambda_.1} parent=19 // pred_check_branch
          %117 = sbr.rel (%p115) target = $region24
        $region23: #{_lambda_.1} parent=19 // pred_region
          %p118 = scmp.lt.s32.totalorder %s12, 1
          %s119 = scalar_select %p118, %s12, 1
          %s120 = smul.addr %s119, 12
          %s121 = smul.addr %s120, 8
          %s122 = scalar_lea.vmem %s1, %s121
        $region24: #{_lambda_.1} parent=19 // pred_fallthru
          _
      $region20: #{_lambda_.1} parent=5 // pred_fallthru
        _
      %p123 = scmp.le.s32.totalorder 1, %s12
      %p124 = scmp.lt.s32.totalorder %s12, 3
      %p125 = pnand %p123, %p124
      %p126 = pneg %p125
      // Predicated region
      $region25: #{_lambda_.1} parent=5 // pred_check
        _
      $region26: #{_lambda_.1} parent=5 // pred_check_branch
        %128 = sbr.rel (%p125) target = $region28
      $region27: #{_lambda_.1} parent=5 // pred_region
        %s129 = ssub.s32 %s12, 1
        // Predicated region
        $region29: #{_lambda_.1} parent=27 // pred_check
          %p130 = pneg %p33
        $region30: #{_lambda_.1} parent=27 // pred_check_branch
          %132 = sbr.rel (%p130) target = $region32
        $region31: #{_lambda_.1} parent=27 // pred_region
          %133 = dma.done [#allocation4], 16
        $region32: #{_lambda_.1} parent=27 // pred_fallthru
          _
        %134 = sfence
        %p135 = pneg %p33
        %p136 = pneg %p30
        %p137 = scmp.lt.s32.totalorder %s17, 1
        %s138 = scalar_select %p137, %s17, 1
        %s139 = smul.addr %s138, 12
        %s140 = smul.addr %s139, 8
        %s141 = scalar_lea.vmem %s1, %s140
        %p142 = pneg %p59
        %p143 = pneg %p56
        %p144 = pneg %p85
        %p145 = pneg %p82
        %s146 = sand.u32 %s72, 1
        %s147 = scalar_lea.sflag [#allocation3], %s146
        %s148 = sand.u32 %s72, 1
        %s149 = smul.addr %s148, 16
        %s150 = scalar_lea.vmem [#allocation5], %s149
        %p151 = scmp.lt.s32.totalorder %s17, 1
        %s152 = scalar_select %p151, %s17, 1
        %s153 = smul.addr %s152, 12
        %s154 = smul.addr %s153, 8
        %s155 = scalar_lea.vmem %s1, %s154
        %v156 = vld [vmem:[%s155] sm:$0xff]
        %v157 = vld [vmem:[%s155 + $0x8] sm:$0xff]
        %v158 = vld [vmem:[%s155 + $0x10] sm:$0x3f]
        %v159 = vld [vmem:[%s155 + $0x18] sm:$0xff]
        %v160 = vld [vmem:[%s155 + $0x20] sm:$0xff]
        %v161 = vld [vmem:[%s155 + $0x28] sm:$0x3f]
        %v162 = vld [vmem:[%s155 + $0x30] sm:$0xff]
        %v163 = vld [vmem:[%s155 + $0x38] sm:$0xff]
        %v164 = vld [vmem:[%s155 + $0x40] sm:$0x3f]
        %v165 = vld [vmem:[%s155 + $0x48] sm:$0xff]
        %v166 = vld [vmem:[%s155 + $0x50] sm:$0xff]
        %v167 = vld [vmem:[%s155 + $0x58] sm:$0x3f]
        %vm168 = vcmask 179200
        %v169 = vsel %vm168, %v156, 0.0
        %v170 = vsel %vm168, %v159, 0.0
        %v171 = vadd.f32 %v169, %v170
        %v172 = vsel %vm168, %v162, 0.0
        %v173 = vadd.f32 %v171, %v172
        %v174 = vsel %vm168, %v165, 0.0
        %v175 = vadd.f32 %v173, %v174
        %v176 = vsel %vm168, %v157, 0.0
        %v177 = vsel %vm168, %v160, 0.0
        %v178 = vadd.f32 %v176, %v177
        %v179 = vsel %vm168, %v163, 0.0
        %v180 = vadd.f32 %v178, %v179
        %v181 = vsel %vm168, %v166, 0.0
        %v182 = vadd.f32 %v180, %v181
        %vm183 = vcmask 177152
        %v184 = vsel %vm183, %v158, 0.0
        %v185 = vsel %vm183, %v161, 0.0
        %v186 = vadd.f32 %v184, %v185
        %v187 = vsel %vm183, %v164, 0.0
        %v188 = vadd.f32 %v186, %v187
        %v189 = vsel %vm183, %v167, 0.0
        %v190 = vadd.f32 %v188, %v189
        %v191 = vrcp.pop 4.0
        %v192 = vmul.f32 %v175, %v191
        %v193 = vmul.f32 %v182, %v191
        %v194 = vmul.f32 %v190, %v191
        %v195 = vsel %vm168, %v156, -inf
        %v196 = vsel %vm168, %v159, -inf
        %v197 = vsel %vm168, %v162, -inf
        %v198 = vmax.f32 %v195, %v197
        %v199 = vsel %vm168, %v165, -inf
        %v200 = vmax.f32 %v196, %v199
        %v201 = vmax.f32 %v198, %v200
        %v202 = vsel %vm168, %v157, -inf
        %v203 = vsel %vm168, %v160, -inf
        %v204 = vsel %vm168, %v163, -inf
        %v205 = vmax.f32 %v202, %v204
        %v206 = vsel %vm168, %v166, -inf
        %v207 = vmax.f32 %v203, %v206
        %v208 = vmax.f32 %v205, %v207
        %v209 = vsel %vm183, %v158, -inf
        %v210 = vsel %vm183, %v161, -inf
        %v211 = vsel %vm183, %v164, -inf
        %v212 = vmax.f32 %v209, %v211
        %v213 = vsel %vm183, %v167, -inf
        %v214 = vmax.f32 %v210, %v213
        %v215 = vmax.f32 %v212, %v214
        %s216 = sld [smem:[#allocation2]]
        %v217 = vstv %s216
        %v218 = vmul.f32 %v217, %v192
        %v219 = vmul.f32 %v217, %v193
        %v220 = vadd.f32 %v218, 0.0
        %v221 = vadd.f32 %v219, 0.0
        %s222 = sld [smem:[#allocation2 + $0x31]]
        %v223 = vstv %s222
        %v224 = vmul.f32 %v223, %v201
        %v225 = vmul.f32 %v223, %v208
        %v226 = vadd.f32 %v220, %v224
        %v227 = vadd.f32 %v221, %v225
        %s228 = sld [smem:[#allocation2 + $0x1]]
        %v229 = vstv %s228
        %v230 = vmul.f32 %v229, %v192
        %v231 = vmul.f32 %v229, %v193
        %234 = vrot.lane.b32.xlu0 %v230, 127
        %v235 = vpop.permute.xlu0 %234
        %236 = vrot.lane.b32.xlu0 %v231, 127
        %v237 = vpop.permute.xlu0 %236
        %v240 = vadd.f32 %v226, %v235
        %v241 = vadd.f32 %v227, %v237
        %s242 = sld [smem:[#allocation2 + $0x32]]
        %v243 = vstv %s242
        %v244 = vmul.f32 %v243, %v201
        %v245 = vmul.f32 %v243, %v208
        %248 = vrot.lane.b32.xlu0 %v244, 127
        %v249 = vpop.permute.xlu0 %248
        %250 = vrot.lane.b32.xlu0 %v245, 127
        %v251 = vpop.permute.xlu0 %250
        %v254 = vadd.f32 %v240, %v249
        %v255 = vadd.f32 %v241, %v251
        %s256 = sld [smem:[#allocation2 + $0x2]]
        %v257 = vstv %s256
        %v258 = vmul.f32 %v257, %v192
        %v259 = vmul.f32 %v257, %v193
        %262 = vrot.lane.b32.xlu0 %v258, 126
        %v263 = vpop.permute.xlu0 %262
        %264 = vrot.lane.b32.xlu0 %v259, 126
        %v265 = vpop.permute.xlu0 %264
        %v268 = vadd.f32 %v254, %v263
        %v269 = vadd.f32 %v255, %v265
        %s270 = sld [smem:[#allocation2 + $0x33]]
        %v271 = vstv %s270
        %v272 = vmul.f32 %v271, %v201
        %v273 = vmul.f32 %v271, %v208
        %276 = vrot.lane.b32.xlu0 %v272, 126
        %v277 = vpop.permute.xlu0 %276
        %278 = vrot.lane.b32.xlu0 %v273, 126
        %v279 = vpop.permute.xlu0 %278
        %v282 = vadd.f32 %v268, %v277
        %v283 = vadd.f32 %v269, %v279
        %s284 = sld [smem:[#allocation2 + $0x3]]
        %v285 = vstv %s284
        %v286 = vmul.f32 %v285, %v192
        %v287 = vmul.f32 %v285, %v193
        %290 = vrot.lane.b32.xlu0 %v286, 125
        %v291 = vpop.permute.xlu0 %290
        %292 = vrot.lane.b32.xlu0 %v287, 125
        %v293 = vpop.permute.xlu0 %292
        %v296 = vadd.f32 %v282, %v291
        %v297 = vadd.f32 %v283, %v293
        %s298 = sld [smem:[#allocation2 + $0x34]]
        %v299 = vstv %s298
        %v300 = vmul.f32 %v299, %v201
        %v301 = vmul.f32 %v299, %v208
        %304 = vrot.lane.b32.xlu0 %v300, 125
        %v305 = vpop.permute.xlu0 %304
        %306 = vrot.lane.b32.xlu0 %v301, 125
        %v307 = vpop.permute.xlu0 %306
        %v310 = vadd.f32 %v296, %v305
        %v311 = vadd.f32 %v297, %v307
        %s312 = sld [smem:[#allocation2 + $0x4]]
        %v313 = vstv %s312
        %v314 = vmul.f32 %v313, %v192
        %v315 = vmul.f32 %v313, %v193
        %318 = vrot.lane.b32.xlu0 %v314, 124
        %v319 = vpop.permute.xlu0 %318
        %320 = vrot.lane.b32.xlu0 %v315, 124
        %v321 = vpop.permute.xlu0 %320
        %v324 = vadd.f32 %v310, %v319
        %v325 = vadd.f32 %v311, %v321
        %s326 = sld [smem:[#allocation2 + $0x35]]
        %v327 = vstv %s326
        %v328 = vmul.f32 %v327, %v201
        %v329 = vmul.f32 %v327, %v208
        %332 = vrot.lane.b32.xlu0 %v328, 124
        %v333 = vpop.permute.xlu0 %332
        %334 = vrot.lane.b32.xlu0 %v329, 124
        %v335 = vpop.permute.xlu0 %334
        %v338 = vadd.f32 %v324, %v333
        %v339 = vadd.f32 %v325, %v335
        %s340 = sld [smem:[#allocation2 + $0x5]]
        %v341 = vstv %s340
        %v342 = vmul.f32 %v341, %v192
        %v343 = vmul.f32 %v341, %v193
        %346 = vrot.lane.b32.xlu0 %v342, 123
        %v347 = vpop.permute.xlu0 %346
        %348 = vrot.lane.b32.xlu0 %v343, 123
        %v349 = vpop.permute.xlu0 %348
        %v352 = vadd.f32 %v338, %v347
        %v353 = vadd.f32 %v339, %v349
        %s354 = sld [smem:[#allocation2 + $0x36]]
        %v355 = vstv %s354
        %v356 = vmul.f32 %v355, %v201
        %v357 = vmul.f32 %v355, %v208
        %360 = vrot.lane.b32.xlu0 %v356, 123
        %v361 = vpop.permute.xlu0 %360
        %362 = vrot.lane.b32.xlu0 %v357, 123
        %v363 = vpop.permute.xlu0 %362
        %v366 = vadd.f32 %v352, %v361
        %v367 = vadd.f32 %v353, %v363
        %s368 = sld [smem:[#allocation2 + $0x6]]
        %v369 = vstv %s368
        %v370 = vmul.f32 %v369, %v192
        %v371 = vmul.f32 %v369, %v193
        %374 = vrot.lane.b32.xlu0 %v370, 122
        %v375 = vpop.permute.xlu0 %374
        %376 = vrot.lane.b32.xlu0 %v371, 122
        %v377 = vpop.permute.xlu0 %376
        %v380 = vadd.f32 %v366, %v375
        %v381 = vadd.f32 %v367, %v377
        %s382 = sld [smem:[#allocation2 + $0x37]]
        %v383 = vstv %s382
        %v384 = vmul.f32 %v383, %v201
        %v385 = vmul.f32 %v383, %v208
        %388 = vrot.lane.b32.xlu0 %v384, 122
        %v389 = vpop.permute.xlu0 %388
        %390 = vrot.lane.b32.xlu0 %v385, 122
        %v391 = vpop.permute.xlu0 %390
        %v394 = vadd.f32 %v380, %v389
        %v395 = vadd.f32 %v381, %v391
        %s396 = sld [smem:[#allocation2 + $0x7]]
        %v397 = vstv %s396
        %v398 = vmul.f32 %v397, %v192
        %v399 = vmul.f32 %v397, %v193
        %v400 = vmul.f32 %v397, %v194
        %vm404 = vcmask 1046528
        %v405 = vrot.slane %v398, 1
        %v406 = vrot.slane %v399, 1
        %v407 = vsel %vm404, %v405, %v406
        %v408 = vrot.slane %v400, 1
        %v409 = vsel %vm404, %v406, %v408
        %v412 = vadd.f32 %v394, %v407
        %v413 = vadd.f32 %v395, %v409
        %s414 = sld [smem:[#allocation2 + $0x38]]
        %v415 = vstv %s414
        %v416 = vmul.f32 %v415, %v201
        %v417 = vmul.f32 %v415, %v208
        %v418 = vmul.f32 %v415, %v215
        %v422 = vrot.slane %v416, 1
        %v423 = vrot.slane %v417, 1
        %v424 = vsel %vm404, %v422, %v423
        %v425 = vrot.slane %v418, 1
        %v426 = vsel %vm404, %v423, %v425
        %v429 = vadd.f32 %v412, %v424
        %v430 = vadd.f32 %v413, %v426
        %s431 = sld [smem:[#allocation2 + $0x8]]
        %v432 = vstv %s431
        %v433 = vmul.f32 %v432, %v192
        %v434 = vmul.f32 %v432, %v193
        %v435 = vmul.f32 %v432, %v194
        %v439 = vrot.slane %v433, 1
        %v440 = vrot.slane %v434, 1
        %v441 = vsel %vm404, %v439, %v440
        %v442 = vrot.slane %v435, 1
        %v443 = vsel %vm404, %v440, %v442
        %444 = vrot.lane.b32.xlu0 %v441, 127
        %v445 = vpop.permute.xlu0 %444
        %446 = vrot.lane.b32.xlu0 %v443, 127
        %v447 = vpop.permute.xlu0 %446
        %v450 = vadd.f32 %v429, %v445
        %v451 = vadd.f32 %v430, %v447
        %s452 = sld [smem:[#allocation2 + $0x39]]
        %v453 = vstv %s452
        %v454 = vmul.f32 %v453, %v201
        %v455 = vmul.f32 %v453, %v208
        %v456 = vmul.f32 %v453, %v215
        %v460 = vrot.slane %v454, 1
        %v461 = vrot.slane %v455, 1
        %v462 = vsel %vm404, %v460, %v461
        %v463 = vrot.slane %v456, 1
        %v464 = vsel %vm404, %v461, %v463
        %465 = vrot.lane.b32.xlu0 %v462, 127
        %v466 = vpop.permute.xlu0 %465
        %467 = vrot.lane.b32.xlu0 %v464, 127
        %v468 = vpop.permute.xlu0 %467
        %v471 = vadd.f32 %v450, %v466
        %v472 = vadd.f32 %v451, %v468
        %s473 = sld [smem:[#allocation2 + $0x9]]
        %v474 = vstv %s473
        %v475 = vmul.f32 %v474, %v192
        %v476 = vmul.f32 %v474, %v193
        %v477 = vmul.f32 %v474, %v194
        %v481 = vrot.slane %v475, 1
        %v482 = vrot.slane %v476, 1
        %v483 = vsel %vm404, %v481, %v482
        %v484 = vrot.slane %v477, 1
        %v485 = vsel %vm404, %v482, %v484
        %486 = vrot.lane.b32.xlu0 %v483, 126
        %v487 = vpop.permute.xlu0 %486
        %488 = vrot.lane.b32.xlu0 %v485, 126
        %v489 = vpop.permute.xlu0 %488
        %v492 = vadd.f32 %v471, %v487
        %v493 = vadd.f32 %v472, %v489
        %s494 = sld [smem:[#allocation2 + $0x3a]]
        %v495 = vstv %s494
        %v496 = vmul.f32 %v495, %v201
        %v497 = vmul.f32 %v495, %v208
        %v498 = vmul.f32 %v495, %v215
        %v502 = vrot.slane %v496, 1
        %v503 = vrot.slane %v497, 1
        %v504 = vsel %vm404, %v502, %v503
        %v505 = vrot.slane %v498, 1
        %v506 = vsel %vm404, %v503, %v505
        %507 = vrot.lane.b32.xlu0 %v504, 126
        %v508 = vpop.permute.xlu0 %507
        %509 = vrot.lane.b32.xlu0 %v506, 126
        %v510 = vpop.permute.xlu0 %509
        %v513 = vadd.f32 %v492, %v508
        %v514 = vadd.f32 %v493, %v510
        %s515 = sld [smem:[#allocation2 + $0xa]]
        %v516 = vstv %s515
        %v517 = vmul.f32 %v516, %v192
        %v518 = vmul.f32 %v516, %v193
        %v519 = vmul.f32 %v516, %v194
        %v523 = vrot.slane %v517, 1
        %v524 = vrot.slane %v518, 1
        %v525 = vsel %vm404, %v523, %v524
        %v526 = vrot.slane %v519, 1
        %v527 = vsel %vm404, %v524, %v526
        %528 = vrot.lane.b32.xlu0 %v525, 125
        %v529 = vpop.permute.xlu0 %528
        %530 = vrot.lane.b32.xlu0 %v527, 125
        %v531 = vpop.permute.xlu0 %530
        %v534 = vadd.f32 %v513, %v529
        %v535 = vadd.f32 %v514, %v531
        %s536 = sld [smem:[#allocation2 + $0x3b]]
        %v537 = vstv %s536
        %v538 = vmul.f32 %v537, %v201
        %v539 = vmul.f32 %v537, %v208
        %v540 = vmul.f32 %v537, %v215
        %v544 = vrot.slane %v538, 1
        %v545 = vrot.slane %v539, 1
        %v546 = vsel %vm404, %v544, %v545
        %v547 = vrot.slane %v540, 1
        %v548 = vsel %vm404, %v545, %v547
        %549 = vrot.lane.b32.xlu0 %v546, 125
        %v550 = vpop.permute.xlu0 %549
        %551 = vrot.lane.b32.xlu0 %v548, 125
        %v552 = vpop.permute.xlu0 %551
        %v555 = vadd.f32 %v534, %v550
        %v556 = vadd.f32 %v535, %v552
        %s557 = sld [smem:[#allocation2 + $0xb]]
        %v558 = vstv %s557
        %v559 = vmul.f32 %v558, %v192
        %v560 = vmul.f32 %v558, %v193
        %v561 = vmul.f32 %v558, %v194
        %v565 = vrot.slane %v559, 1
        %v566 = vrot.slane %v560, 1
        %v567 = vsel %vm404, %v565, %v566
        %v568 = vrot.slane %v561, 1
        %v569 = vsel %vm404, %v566, %v568
        %570 = vrot.lane.b32.xlu0 %v567, 124
        %v571 = vpop.permute.xlu0 %570
        %572 = vrot.lane.b32.xlu0 %v569, 124
        %v573 = vpop.permute.xlu0 %572
        %v576 = vadd.f32 %v555, %v571
        %v577 = vadd.f32 %v556, %v573
        %s578 = sld [smem:[#allocation2 + $0x3c]]
        %v579 = vstv %s578
        %v580 = vmul.f32 %v579, %v201
        %v581 = vmul.f32 %v579, %v208
        %v582 = vmul.f32 %v579, %v215
        %v586 = vrot.slane %v580, 1
        %v587 = vrot.slane %v581, 1
        %v588 = vsel %vm404, %v586, %v587
        %v589 = vrot.slane %v582, 1
        %v590 = vsel %vm404, %v587, %v589
        %591 = vrot.lane.b32.xlu0 %v588, 124
        %v592 = vpop.permute.xlu0 %591
        %593 = vrot.lane.b32.xlu0 %v590, 124
        %v594 = vpop.permute.xlu0 %593
        %v597 = vadd.f32 %v576, %v592
        %v598 = vadd.f32 %v577, %v594
        %s599 = sld [smem:[#allocation2 + $0xc]]
        %v600 = vstv %s599
        %v601 = vmul.f32 %v600, %v192
        %v602 = vmul.f32 %v600, %v193
        %v603 = vmul.f32 %v600, %v194
        %v607 = vrot.slane %v601, 1
        %v608 = vrot.slane %v602, 1
        %v609 = vsel %vm404, %v607, %v608
        %v610 = vrot.slane %v603, 1
        %v611 = vsel %vm404, %v608, %v610
        %612 = vrot.lane.b32.xlu0 %v609, 123
        %v613 = vpop.permute.xlu0 %612
        %614 = vrot.lane.b32.xlu0 %v611, 123
        %v615 = vpop.permute.xlu0 %614
        %v618 = vadd.f32 %v597, %v613
        %v619 = vadd.f32 %v598, %v615
        %s620 = sld [smem:[#allocation2 + $0x3d]]
        %v621 = vstv %s620
        %v622 = vmul.f32 %v621, %v201
        %v623 = vmul.f32 %v621, %v208
        %v624 = vmul.f32 %v621, %v215
        %v628 = vrot.slane %v622, 1
        %v629 = vrot.slane %v623, 1
        %v630 = vsel %vm404, %v628, %v629
        %v631 = vrot.slane %v624, 1
        %v632 = vsel %vm404, %v629, %v631
        %633 = vrot.lane.b32.xlu0 %v630, 123
        %v634 = vpop.permute.xlu0 %633
        %635 = vrot.lane.b32.xlu0 %v632, 123
        %v636 = vpop.permute.xlu0 %635
        %v639 = vadd.f32 %v618, %v634
        %v640 = vadd.f32 %v619, %v636
        %s641 = sld [smem:[#allocation2 + $0xd]]
        %v642 = vstv %s641
        %v643 = vmul.f32 %v642, %v192
        %v644 = vmul.f32 %v642, %v193
        %v645 = vmul.f32 %v642, %v194
        %v649 = vrot.slane %v643, 1
        %v650 = vrot.slane %v644, 1
        %v651 = vsel %vm404, %v649, %v650
        %v652 = vrot.slane %v645, 1
        %v653 = vsel %vm404, %v650, %v652
        %654 = vrot.lane.b32.xlu0 %v651, 122
        %v655 = vpop.permute.xlu0 %654
        %656 = vrot.lane.b32.xlu0 %v653, 122
        %v657 = vpop.permute.xlu0 %656
        %v660 = vadd.f32 %v639, %v655
        %v661 = vadd.f32 %v640, %v657
        %s662 = sld [smem:[#allocation2 + $0x3e]]
        %v663 = vstv %s662
        %v664 = vmul.f32 %v663, %v201
        %v665 = vmul.f32 %v663, %v208
        %v666 = vmul.f32 %v663, %v215
        %v670 = vrot.slane %v664, 1
        %v671 = vrot.slane %v665, 1
        %v672 = vsel %vm404, %v670, %v671
        %v673 = vrot.slane %v666, 1
        %v674 = vsel %vm404, %v671, %v673
        %675 = vrot.lane.b32.xlu0 %v672, 122
        %v676 = vpop.permute.xlu0 %675
        %677 = vrot.lane.b32.xlu0 %v674, 122
        %v678 = vpop.permute.xlu0 %677
        %v681 = vadd.f32 %v660, %v676
        %v682 = vadd.f32 %v661, %v678
        %s683 = sld [smem:[#allocation2 + $0xe]]
        %v684 = vstv %s683
        %v685 = vmul.f32 %v684, %v192
        %v686 = vmul.f32 %v684, %v193
        %v687 = vmul.f32 %v684, %v194
        %vm691 = vcmask 1045504
        %v692 = vrot.slane %v685, 2
        %v693 = vrot.slane %v686, 2
        %v694 = vsel %vm691, %v692, %v693
        %v695 = vrot.slane %v687, 2
        %v696 = vsel %vm691, %v693, %v695
        %v699 = vadd.f32 %v681, %v694
        %v700 = vadd.f32 %v682, %v696
        %s701 = sld [smem:[#allocation2 + $0x3f]]
        %v702 = vstv %s701
        %v703 = vmul.f32 %v702, %v201
        %v704 = vmul.f32 %v702, %v208
        %v705 = vmul.f32 %v702, %v215
        %v709 = vrot.slane %v703, 2
        %v710 = vrot.slane %v704, 2
        %v711 = vsel %vm691, %v709, %v710
        %v712 = vrot.slane %v705, 2
        %v713 = vsel %vm691, %v710, %v712
        %v716 = vadd.f32 %v699, %v711
        %v717 = vadd.f32 %v700, %v713
        %s718 = sld [smem:[#allocation2 + $0xf]]
        %v719 = vstv %s718
        %v720 = vmul.f32 %v719, %v192
        %v721 = vmul.f32 %v719, %v193
        %v722 = vmul.f32 %v719, %v194
        %v726 = vrot.slane %v720, 2
        %v727 = vrot.slane %v721, 2
        %v728 = vsel %vm691, %v726, %v727
        %v729 = vrot.slane %v722, 2
        %v730 = vsel %vm691, %v727, %v729
        %731 = vrot.lane.b32.xlu0 %v728, 127
        %v732 = vpop.permute.xlu0 %731
        %733 = vrot.lane.b32.xlu0 %v730, 127
        %v734 = vpop.permute.xlu0 %733
        %v737 = vadd.f32 %v716, %v732
        %v738 = vadd.f32 %v717, %v734
        %s739 = sld [smem:[#allocation2 + $0x40]]
        %v740 = vstv %s739
        %v741 = vmul.f32 %v740, %v201
        %v742 = vmul.f32 %v740, %v208
        %v743 = vmul.f32 %v740, %v215
        %v747 = vrot.slane %v741, 2
        %v748 = vrot.slane %v742, 2
        %v749 = vsel %vm691, %v747, %v748
        %v750 = vrot.slane %v743, 2
        %v751 = vsel %vm691, %v748, %v750
        %752 = vrot.lane.b32.xlu0 %v749, 127
        %v753 = vpop.permute.xlu0 %752
        %754 = vrot.lane.b32.xlu0 %v751, 127
        %v755 = vpop.permute.xlu0 %754
        %v758 = vadd.f32 %v737, %v753
        %v759 = vadd.f32 %v738, %v755
        %s760 = sld [smem:[#allocation2 + $0x10]]
        %v761 = vstv %s760
        %v762 = vmul.f32 %v761, %v192
        %v763 = vmul.f32 %v761, %v193
        %v764 = vmul.f32 %v761, %v194
        %v768 = vrot.slane %v762, 2
        %v769 = vrot.slane %v763, 2
        %v770 = vsel %vm691, %v768, %v769
        %v771 = vrot.slane %v764, 2
        %v772 = vsel %vm691, %v769, %v771
        %773 = vrot.lane.b32.xlu0 %v770, 126
        %v774 = vpop.permute.xlu0 %773
        %775 = vrot.lane.b32.xlu0 %v772, 126
        %v776 = vpop.permute.xlu0 %775
        %v779 = vadd.f32 %v758, %v774
        %v780 = vadd.f32 %v759, %v776
        %s781 = sld [smem:[#allocation2 + $0x41]]
        %v782 = vstv %s781
        %v783 = vmul.f32 %v782, %v201
        %v784 = vmul.f32 %v782, %v208
        %v785 = vmul.f32 %v782, %v215
        %v789 = vrot.slane %v783, 2
        %v790 = vrot.slane %v784, 2
        %v791 = vsel %vm691, %v789, %v790
        %v792 = vrot.slane %v785, 2
        %v793 = vsel %vm691, %v790, %v792
        %794 = vrot.lane.b32.xlu0 %v791, 126
        %v795 = vpop.permute.xlu0 %794
        %796 = vrot.lane.b32.xlu0 %v793, 126
        %v797 = vpop.permute.xlu0 %796
        %v800 = vadd.f32 %v779, %v795
        %v801 = vadd.f32 %v780, %v797
        %s802 = sld [smem:[#allocation2 + $0x11]]
        %v803 = vstv %s802
        %v804 = vmul.f32 %v803, %v192
        %v805 = vmul.f32 %v803, %v193
        %v806 = vmul.f32 %v803, %v194
        %v810 = vrot.slane %v804, 2
        %v811 = vrot.slane %v805, 2
        %v812 = vsel %vm691, %v810, %v811
        %v813 = vrot.slane %v806, 2
        %v814 = vsel %vm691, %v811, %v813
        %815 = vrot.lane.b32.xlu0 %v812, 125
        %v816 = vpop.permute.xlu0 %815
        %817 = vrot.lane.b32.xlu0 %v814, 125
        %v818 = vpop.permute.xlu0 %817
        %v821 = vadd.f32 %v800, %v816
        %v822 = vadd.f32 %v801, %v818
        %s823 = sld [smem:[#allocation2 + $0x42]]
        %v824 = vstv %s823
        %v825 = vmul.f32 %v824, %v201
        %v826 = vmul.f32 %v824, %v208
        %v827 = vmul.f32 %v824, %v215
        %v831 = vrot.slane %v825, 2
        %v832 = vrot.slane %v826, 2
        %v833 = vsel %vm691, %v831, %v832
        %v834 = vrot.slane %v827, 2
        %v835 = vsel %vm691, %v832, %v834
        %836 = vrot.lane.b32.xlu0 %v833, 125
        %v837 = vpop.permute.xlu0 %836
        %838 = vrot.lane.b32.xlu0 %v835, 125
        %v839 = vpop.permute.xlu0 %838
        %v842 = vadd.f32 %v821, %v837
        %v843 = vadd.f32 %v822, %v839
        %s844 = sld [smem:[#allocation2 + $0x12]]
        %v845 = vstv %s844
        %v846 = vmul.f32 %v845, %v192
        %v847 = vmul.f32 %v845, %v193
        %v848 = vmul.f32 %v845, %v194
        %v852 = vrot.slane %v846, 2
        %v853 = vrot.slane %v847, 2
        %v854 = vsel %vm691, %v852, %v853
        %v855 = vrot.slane %v848, 2
        %v856 = vsel %vm691, %v853, %v855
        %857 = vrot.lane.b32.xlu0 %v854, 124
        %v858 = vpop.permute.xlu0 %857
        %859 = vrot.lane.b32.xlu0 %v856, 124
        %v860 = vpop.permute.xlu0 %859
        %v863 = vadd.f32 %v842, %v858
        %v864 = vadd.f32 %v843, %v860
        %s865 = sld [smem:[#allocation2 + $0x43]]
        %v866 = vstv %s865
        %v867 = vmul.f32 %v866, %v201
        %v868 = vmul.f32 %v866, %v208
        %v869 = vmul.f32 %v866, %v215
        %v873 = vrot.slane %v867, 2
        %v874 = vrot.slane %v868, 2
        %v875 = vsel %vm691, %v873, %v874
        %v876 = vrot.slane %v869, 2
        %v877 = vsel %vm691, %v874, %v876
        %878 = vrot.lane.b32.xlu0 %v875, 124
        %v879 = vpop.permute.xlu0 %878
        %880 = vrot.lane.b32.xlu0 %v877, 124
        %v881 = vpop.permute.xlu0 %880
        %v884 = vadd.f32 %v863, %v879
        %v885 = vadd.f32 %v864, %v881
        %s886 = sld [smem:[#allocation2 + $0x13]]
        %v887 = vstv %s886
        %v888 = vmul.f32 %v887, %v192
        %v889 = vmul.f32 %v887, %v193
        %v890 = vmul.f32 %v887, %v194
        %v894 = vrot.slane %v888, 2
        %v895 = vrot.slane %v889, 2
        %v896 = vsel %vm691, %v894, %v895
        %v897 = vrot.slane %v890, 2
        %v898 = vsel %vm691, %v895, %v897
        %899 = vrot.lane.b32.xlu0 %v896, 123
        %v900 = vpop.permute.xlu0 %899
        %901 = vrot.lane.b32.xlu0 %v898, 123
        %v902 = vpop.permute.xlu0 %901
        %v905 = vadd.f32 %v884, %v900
        %v906 = vadd.f32 %v885, %v902
        %s907 = sld [smem:[#allocation2 + $0x44]]
        %v908 = vstv %s907
        %v909 = vmul.f32 %v908, %v201
        %v910 = vmul.f32 %v908, %v208
        %v911 = vmul.f32 %v908, %v215
        %v915 = vrot.slane %v909, 2
        %v916 = vrot.slane %v910, 2
        %v917 = vsel %vm691, %v915, %v916
        %v918 = vrot.slane %v911, 2
        %v919 = vsel %vm691, %v916, %v918
        %920 = vrot.lane.b32.xlu0 %v917, 123
        %v921 = vpop.permute.xlu0 %920
        %922 = vrot.lane.b32.xlu0 %v919, 123
        %v923 = vpop.permute.xlu0 %922
        %v926 = vadd.f32 %v905, %v921
        %v927 = vadd.f32 %v906, %v923
        %s928 = sld [smem:[#allocation2 + $0x14]]
        %v929 = vstv %s928
        %v930 = vmul.f32 %v929, %v192
        %v931 = vmul.f32 %v929, %v193
        %v932 = vmul.f32 %v929, %v194
        %v936 = vrot.slane %v930, 2
        %v937 = vrot.slane %v931, 2
        %v938 = vsel %vm691, %v936, %v937
        %v939 = vrot.slane %v932, 2
        %v940 = vsel %vm691, %v937, %v939
        %941 = vrot.lane.b32.xlu0 %v938, 122
        %v942 = vpop.permute.xlu0 %941
        %943 = vrot.lane.b32.xlu0 %v940, 122
        %v944 = vpop.permute.xlu0 %943
        %v947 = vadd.f32 %v926, %v942
        %v948 = vadd.f32 %v927, %v944
        %s949 = sld [smem:[#allocation2 + $0x45]]
        %v950 = vstv %s949
        %v951 = vmul.f32 %v950, %v201
        %v952 = vmul.f32 %v950, %v208
        %v953 = vmul.f32 %v950, %v215
        %v957 = vrot.slane %v951, 2
        %v958 = vrot.slane %v952, 2
        %v959 = vsel %vm691, %v957, %v958
        %v960 = vrot.slane %v953, 2
        %v961 = vsel %vm691, %v958, %v960
        %962 = vrot.lane.b32.xlu0 %v959, 122
        %v963 = vpop.permute.xlu0 %962
        %964 = vrot.lane.b32.xlu0 %v961, 122
        %v965 = vpop.permute.xlu0 %964
        %v968 = vadd.f32 %v947, %v963
        %v969 = vadd.f32 %v948, %v965
        %s970 = sld [smem:[#allocation2 + $0x15]]
        %v971 = vstv %s970
        %v972 = vmul.f32 %v971, %v192
        %v973 = vmul.f32 %v971, %v193
        %v974 = vmul.f32 %v971, %v194
        %vm978 = vcmask 1044480
        %v979 = vrot.slane %v972, 3
        %v980 = vrot.slane %v973, 3
        %v981 = vsel %vm978, %v979, %v980
        %v982 = vrot.slane %v974, 3
        %v983 = vsel %vm978, %v980, %v982
        %v986 = vadd.f32 %v968, %v981
        %v987 = vadd.f32 %v969, %v983
        %s988 = sld [smem:[#allocation2 + $0x46]]
        %v989 = vstv %s988
        %v990 = vmul.f32 %v989, %v201
        %v991 = vmul.f32 %v989, %v208
        %v992 = vmul.f32 %v989, %v215
        %v996 = vrot.slane %v990, 3
        %v997 = vrot.slane %v991, 3
        %v998 = vsel %vm978, %v996, %v997
        %v999 = vrot.slane %v992, 3
        %v1000 = vsel %vm978, %v997, %v999
        %v1003 = vadd.f32 %v986, %v998
        %v1004 = vadd.f32 %v987, %v1000
        %s1005 = sld [smem:[#allocation2 + $0x16]]
        %v1006 = vstv %s1005
        %v1007 = vmul.f32 %v1006, %v192
        %v1008 = vmul.f32 %v1006, %v193
        %v1009 = vmul.f32 %v1006, %v194
        %v1013 = vrot.slane %v1007, 3
        %v1014 = vrot.slane %v1008, 3
        %v1015 = vsel %vm978, %v1013, %v1014
        %v1016 = vrot.slane %v1009, 3
        %v1017 = vsel %vm978, %v1014, %v1016
        %1018 = vrot.lane.b32.xlu0 %v1015, 127
        %v1019 = vpop.permute.xlu0 %1018
        %1020 = vrot.lane.b32.xlu0 %v1017, 127
        %v1021 = vpop.permute.xlu0 %1020
        %v1024 = vadd.f32 %v1003, %v1019
        %v1025 = vadd.f32 %v1004, %v1021
        %s1026 = sld [smem:[#allocation2 + $0x47]]
        %v1027 = vstv %s1026
        %v1028 = vmul.f32 %v1027, %v201
        %v1029 = vmul.f32 %v1027, %v208
        %v1030 = vmul.f32 %v1027, %v215
        %v1034 = vrot.slane %v1028, 3
        %v1035 = vrot.slane %v1029, 3
        %v1036 = vsel %vm978, %v1034, %v1035
        %v1037 = vrot.slane %v1030, 3
        %v1038 = vsel %vm978, %v1035, %v1037
        %1039 = vrot.lane.b32.xlu0 %v1036, 127
        %v1040 = vpop.permute.xlu0 %1039
        %1041 = vrot.lane.b32.xlu0 %v1038, 127
        %v1042 = vpop.permute.xlu0 %1041
        %v1045 = vadd.f32 %v1024, %v1040
        %v1046 = vadd.f32 %v1025, %v1042
        %s1047 = sld [smem:[#allocation2 + $0x17]]
        %v1048 = vstv %s1047
        %v1049 = vmul.f32 %v1048, %v192
        %v1050 = vmul.f32 %v1048, %v193
        %v1051 = vmul.f32 %v1048, %v194
        %v1055 = vrot.slane %v1049, 3
        %v1056 = vrot.slane %v1050, 3
        %v1057 = vsel %vm978, %v1055, %v1056
        %v1058 = vrot.slane %v1051, 3
        %v1059 = vsel %vm978, %v1056, %v1058
        %1060 = vrot.lane.b32.xlu0 %v1057, 126
        %v1061 = vpop.permute.xlu0 %1060
        %1062 = vrot.lane.b32.xlu0 %v1059, 126
        %v1063 = vpop.permute.xlu0 %1062
        %v1066 = vadd.f32 %v1045, %v1061
        %v1067 = vadd.f32 %v1046, %v1063
        %s1068 = sld [smem:[#allocation2 + $0x48]]
        %v1069 = vstv %s1068
        %v1070 = vmul.f32 %v1069, %v201
        %v1071 = vmul.f32 %v1069, %v208
        %v1072 = vmul.f32 %v1069, %v215
        %v1076 = vrot.slane %v1070, 3
        %v1077 = vrot.slane %v1071, 3
        %v1078 = vsel %vm978, %v1076, %v1077
        %v1079 = vrot.slane %v1072, 3
        %v1080 = vsel %vm978, %v1077, %v1079
        %1081 = vrot.lane.b32.xlu0 %v1078, 126
        %v1082 = vpop.permute.xlu0 %1081
        %1083 = vrot.lane.b32.xlu0 %v1080, 126
        %v1084 = vpop.permute.xlu0 %1083
        %v1087 = vadd.f32 %v1066, %v1082
        %v1088 = vadd.f32 %v1067, %v1084
        %s1089 = sld [smem:[#allocation2 + $0x18]]
        %v1090 = vstv %s1089
        %v1091 = vmul.f32 %v1090, %v192
        %v1092 = vmul.f32 %v1090, %v193
        %v1093 = vmul.f32 %v1090, %v194
        %v1097 = vrot.slane %v1091, 3
        %v1098 = vrot.slane %v1092, 3
        %v1099 = vsel %vm978, %v1097, %v1098
        %v1100 = vrot.slane %v1093, 3
        %v1101 = vsel %vm978, %v1098, %v1100
        %1102 = vrot.lane.b32.xlu0 %v1099, 125
        %v1103 = vpop.permute.xlu0 %1102
        %1104 = vrot.lane.b32.xlu0 %v1101, 125
        %v1105 = vpop.permute.xlu0 %1104
        %v1108 = vadd.f32 %v1087, %v1103
        %v1109 = vadd.f32 %v1088, %v1105
        %s1110 = sld [smem:[#allocation2 + $0x49]]
        %v1111 = vstv %s1110
        %v1112 = vmul.f32 %v1111, %v201
        %v1113 = vmul.f32 %v1111, %v208
        %v1114 = vmul.f32 %v1111, %v215
        %v1118 = vrot.slane %v1112, 3
        %v1119 = vrot.slane %v1113, 3
        %v1120 = vsel %vm978, %v1118, %v1119
        %v1121 = vrot.slane %v1114, 3
        %v1122 = vsel %vm978, %v1119, %v1121
        %1123 = vrot.lane.b32.xlu0 %v1120, 125
        %v1124 = vpop.permute.xlu0 %1123
        %1125 = vrot.lane.b32.xlu0 %v1122, 125
        %v1126 = vpop.permute.xlu0 %1125
        %v1129 = vadd.f32 %v1108, %v1124
        %v1130 = vadd.f32 %v1109, %v1126
        %s1131 = sld [smem:[#allocation2 + $0x19]]
        %v1132 = vstv %s1131
        %v1133 = vmul.f32 %v1132, %v192
        %v1134 = vmul.f32 %v1132, %v193
        %v1135 = vmul.f32 %v1132, %v194
        %v1139 = vrot.slane %v1133, 3
        %v1140 = vrot.slane %v1134, 3
        %v1141 = vsel %vm978, %v1139, %v1140
        %v1142 = vrot.slane %v1135, 3
        %v1143 = vsel %vm978, %v1140, %v1142
        %1144 = vrot.lane.b32.xlu0 %v1141, 124
        %v1145 = vpop.permute.xlu0 %1144
        %1146 = vrot.lane.b32.xlu0 %v1143, 124
        %v1147 = vpop.permute.xlu0 %1146
        %v1150 = vadd.f32 %v1129, %v1145
        %v1151 = vadd.f32 %v1130, %v1147
        %s1152 = sld [smem:[#allocation2 + $0x4a]]
        %v1153 = vstv %s1152
        %v1154 = vmul.f32 %v1153, %v201
        %v1155 = vmul.f32 %v1153, %v208
        %v1156 = vmul.f32 %v1153, %v215
        %v1160 = vrot.slane %v1154, 3
        %v1161 = vrot.slane %v1155, 3
        %v1162 = vsel %vm978, %v1160, %v1161
        %v1163 = vrot.slane %v1156, 3
        %v1164 = vsel %vm978, %v1161, %v1163
        %1165 = vrot.lane.b32.xlu0 %v1162, 124
        %v1166 = vpop.permute.xlu0 %1165
        %1167 = vrot.lane.b32.xlu0 %v1164, 124
        %v1168 = vpop.permute.xlu0 %1167
        %v1171 = vadd.f32 %v1150, %v1166
        %v1172 = vadd.f32 %v1151, %v1168
        %s1173 = sld [smem:[#allocation2 + $0x1a]]
        %v1174 = vstv %s1173
        %v1175 = vmul.f32 %v1174, %v192
        %v1176 = vmul.f32 %v1174, %v193
        %v1177 = vmul.f32 %v1174, %v194
        %v1181 = vrot.slane %v1175, 3
        %v1182 = vrot.slane %v1176, 3
        %v1183 = vsel %vm978, %v1181, %v1182
        %v1184 = vrot.slane %v1177, 3
        %v1185 = vsel %vm978, %v1182, %v1184
        %1186 = vrot.lane.b32.xlu0 %v1183, 123
        %v1187 = vpop.permute.xlu0 %1186
        %1188 = vrot.lane.b32.xlu0 %v1185, 123
        %v1189 = vpop.permute.xlu0 %1188
        %v1192 = vadd.f32 %v1171, %v1187
        %v1193 = vadd.f32 %v1172, %v1189
        %s1194 = sld [smem:[#allocation2 + $0x4b]]
        %v1195 = vstv %s1194
        %v1196 = vmul.f32 %v1195, %v201
        %v1197 = vmul.f32 %v1195, %v208
        %v1198 = vmul.f32 %v1195, %v215
        %v1202 = vrot.slane %v1196, 3
        %v1203 = vrot.slane %v1197, 3
        %v1204 = vsel %vm978, %v1202, %v1203
        %v1205 = vrot.slane %v1198, 3
        %v1206 = vsel %vm978, %v1203, %v1205
        %1207 = vrot.lane.b32.xlu0 %v1204, 123
        %v1208 = vpop.permute.xlu0 %1207
        %1209 = vrot.lane.b32.xlu0 %v1206, 123
        %v1210 = vpop.permute.xlu0 %1209
        %v1213 = vadd.f32 %v1192, %v1208
        %v1214 = vadd.f32 %v1193, %v1210
        %s1215 = sld [smem:[#allocation2 + $0x1b]]
        %v1216 = vstv %s1215
        %v1217 = vmul.f32 %v1216, %v192
        %v1218 = vmul.f32 %v1216, %v193
        %v1219 = vmul.f32 %v1216, %v194
        %v1223 = vrot.slane %v1217, 3
        %v1224 = vrot.slane %v1218, 3
        %v1225 = vsel %vm978, %v1223, %v1224
        %v1226 = vrot.slane %v1219, 3
        %v1227 = vsel %vm978, %v1224, %v1226
        %1228 = vrot.lane.b32.xlu0 %v1225, 122
        %v1229 = vpop.permute.xlu0 %1228
        %1230 = vrot.lane.b32.xlu0 %v1227, 122
        %v1231 = vpop.permute.xlu0 %1230
        %v1234 = vadd.f32 %v1213, %v1229
        %v1235 = vadd.f32 %v1214, %v1231
        %s1236 = sld [smem:[#allocation2 + $0x4c]]
        %v1237 = vstv %s1236
        %v1238 = vmul.f32 %v1237, %v201
        %v1239 = vmul.f32 %v1237, %v208
        %v1240 = vmul.f32 %v1237, %v215
        %v1244 = vrot.slane %v1238, 3
        %v1245 = vrot.slane %v1239, 3
        %v1246 = vsel %vm978, %v1244, %v1245
        %v1247 = vrot.slane %v1240, 3
        %v1248 = vsel %vm978, %v1245, %v1247
        %1249 = vrot.lane.b32.xlu0 %v1246, 122
        %v1250 = vpop.permute.xlu0 %1249
        %1251 = vrot.lane.b32.xlu0 %v1248, 122
        %v1252 = vpop.permute.xlu0 %1251
        %v1255 = vadd.f32 %v1234, %v1250
        %v1256 = vadd.f32 %v1235, %v1252
        %s1257 = sld [smem:[#allocation2 + $0x1c]]
        %v1258 = vstv %s1257
        %v1259 = vmul.f32 %v1258, %v192
        %v1260 = vmul.f32 %v1258, %v193
        %v1261 = vmul.f32 %v1258, %v194
        %vm1265 = vcmask 1043456
        %v1266 = vrot.slane %v1259, 4
        %v1267 = vrot.slane %v1260, 4
        %v1268 = vsel %vm1265, %v1266, %v1267
        %v1269 = vrot.slane %v1261, 4
        %v1270 = vsel %vm1265, %v1267, %v1269
        %v1273 = vadd.f32 %v1255, %v1268
        %v1274 = vadd.f32 %v1256, %v1270
        %s1275 = sld [smem:[#allocation2 + $0x4d]]
        %v1276 = vstv %s1275
        %v1277 = vmul.f32 %v1276, %v201
        %v1278 = vmul.f32 %v1276, %v208
        %v1279 = vmul.f32 %v1276, %v215
        %v1283 = vrot.slane %v1277, 4
        %v1284 = vrot.slane %v1278, 4
        %v1285 = vsel %vm1265, %v1283, %v1284
        %v1286 = vrot.slane %v1279, 4
        %v1287 = vsel %vm1265, %v1284, %v1286
        %v1290 = vadd.f32 %v1273, %v1285
        %v1291 = vadd.f32 %v1274, %v1287
        %s1292 = sld [smem:[#allocation2 + $0x1d]]
        %v1293 = vstv %s1292
        %v1294 = vmul.f32 %v1293, %v192
        %v1295 = vmul.f32 %v1293, %v193
        %v1296 = vmul.f32 %v1293, %v194
        %v1300 = vrot.slane %v1294, 4
        %v1301 = vrot.slane %v1295, 4
        %v1302 = vsel %vm1265, %v1300, %v1301
        %v1303 = vrot.slane %v1296, 4
        %v1304 = vsel %vm1265, %v1301, %v1303
        %1305 = vrot.lane.b32.xlu0 %v1302, 127
        %v1306 = vpop.permute.xlu0 %1305
        %1307 = vrot.lane.b32.xlu0 %v1304, 127
        %v1308 = vpop.permute.xlu0 %1307
        %v1311 = vadd.f32 %v1290, %v1306
        %v1312 = vadd.f32 %v1291, %v1308
        %s1313 = sld [smem:[#allocation2 + $0x4e]]
        %v1314 = vstv %s1313
        %v1315 = vmul.f32 %v1314, %v201
        %v1316 = vmul.f32 %v1314, %v208
        %v1317 = vmul.f32 %v1314, %v215
        %v1321 = vrot.slane %v1315, 4
        %v1322 = vrot.slane %v1316, 4
        %v1323 = vsel %vm1265, %v1321, %v1322
        %v1324 = vrot.slane %v1317, 4
        %v1325 = vsel %vm1265, %v1322, %v1324
        %1326 = vrot.lane.b32.xlu0 %v1323, 127
        %v1327 = vpop.permute.xlu0 %1326
        %1328 = vrot.lane.b32.xlu0 %v1325, 127
        %v1329 = vpop.permute.xlu0 %1328
        %v1332 = vadd.f32 %v1311, %v1327
        %v1333 = vadd.f32 %v1312, %v1329
        %s1334 = sld [smem:[#allocation2 + $0x1e]]
        %v1335 = vstv %s1334
        %v1336 = vmul.f32 %v1335, %v192
        %v1337 = vmul.f32 %v1335, %v193
        %v1338 = vmul.f32 %v1335, %v194
        %v1342 = vrot.slane %v1336, 4
        %v1343 = vrot.slane %v1337, 4
        %v1344 = vsel %vm1265, %v1342, %v1343
        %v1345 = vrot.slane %v1338, 4
        %v1346 = vsel %vm1265, %v1343, %v1345
        %1347 = vrot.lane.b32.xlu0 %v1344, 126
        %v1348 = vpop.permute.xlu0 %1347
        %1349 = vrot.lane.b32.xlu0 %v1346, 126
        %v1350 = vpop.permute.xlu0 %1349
        %v1353 = vadd.f32 %v1332, %v1348
        %v1354 = vadd.f32 %v1333, %v1350
        %s1355 = sld [smem:[#allocation2 + $0x4f]]
        %v1356 = vstv %s1355
        %v1357 = vmul.f32 %v1356, %v201
        %v1358 = vmul.f32 %v1356, %v208
        %v1359 = vmul.f32 %v1356, %v215
        %v1363 = vrot.slane %v1357, 4
        %v1364 = vrot.slane %v1358, 4
        %v1365 = vsel %vm1265, %v1363, %v1364
        %v1366 = vrot.slane %v1359, 4
        %v1367 = vsel %vm1265, %v1364, %v1366
        %1368 = vrot.lane.b32.xlu0 %v1365, 126
        %v1369 = vpop.permute.xlu0 %1368
        %1370 = vrot.lane.b32.xlu0 %v1367, 126
        %v1371 = vpop.permute.xlu0 %1370
        %v1374 = vadd.f32 %v1353, %v1369
        %v1375 = vadd.f32 %v1354, %v1371
        %s1376 = sld [smem:[#allocation2 + $0x1f]]
        %v1377 = vstv %s1376
        %v1378 = vmul.f32 %v1377, %v192
        %v1379 = vmul.f32 %v1377, %v193
        %v1380 = vmul.f32 %v1377, %v194
        %v1384 = vrot.slane %v1378, 4
        %v1385 = vrot.slane %v1379, 4
        %v1386 = vsel %vm1265, %v1384, %v1385
        %v1387 = vrot.slane %v1380, 4
        %v1388 = vsel %vm1265, %v1385, %v1387
        %1389 = vrot.lane.b32.xlu0 %v1386, 125
        %v1390 = vpop.permute.xlu0 %1389
        %1391 = vrot.lane.b32.xlu0 %v1388, 125
        %v1392 = vpop.permute.xlu0 %1391
        %v1395 = vadd.f32 %v1374, %v1390
        %v1396 = vadd.f32 %v1375, %v1392
        %s1397 = sld [smem:[#allocation2 + $0x50]]
        %v1398 = vstv %s1397
        %v1399 = vmul.f32 %v1398, %v201
        %v1400 = vmul.f32 %v1398, %v208
        %v1401 = vmul.f32 %v1398, %v215
        %v1405 = vrot.slane %v1399, 4
        %v1406 = vrot.slane %v1400, 4
        %v1407 = vsel %vm1265, %v1405, %v1406
        %v1408 = vrot.slane %v1401, 4
        %v1409 = vsel %vm1265, %v1406, %v1408
        %1410 = vrot.lane.b32.xlu0 %v1407, 125
        %v1411 = vpop.permute.xlu0 %1410
        %1412 = vrot.lane.b32.xlu0 %v1409, 125
        %v1413 = vpop.permute.xlu0 %1412
        %v1416 = vadd.f32 %v1395, %v1411
        %v1417 = vadd.f32 %v1396, %v1413
        %s1418 = sld [smem:[#allocation2 + $0x20]]
        %v1419 = vstv %s1418
        %v1420 = vmul.f32 %v1419, %v192
        %v1421 = vmul.f32 %v1419, %v193
        %v1422 = vmul.f32 %v1419, %v194
        %v1426 = vrot.slane %v1420, 4
        %v1427 = vrot.slane %v1421, 4
        %v1428 = vsel %vm1265, %v1426, %v1427
        %v1429 = vrot.slane %v1422, 4
        %v1430 = vsel %vm1265, %v1427, %v1429
        %1431 = vrot.lane.b32.xlu0 %v1428, 124
        %v1432 = vpop.permute.xlu0 %1431
        %1433 = vrot.lane.b32.xlu0 %v1430, 124
        %v1434 = vpop.permute.xlu0 %1433
        %v1437 = vadd.f32 %v1416, %v1432
        %v1438 = vadd.f32 %v1417, %v1434
        %s1439 = sld [smem:[#allocation2 + $0x51]]
        %v1440 = vstv %s1439
        %v1441 = vmul.f32 %v1440, %v201
        %v1442 = vmul.f32 %v1440, %v208
        %v1443 = vmul.f32 %v1440, %v215
        %v1447 = vrot.slane %v1441, 4
        %v1448 = vrot.slane %v1442, 4
        %v1449 = vsel %vm1265, %v1447, %v1448
        %v1450 = vrot.slane %v1443, 4
        %v1451 = vsel %vm1265, %v1448, %v1450
        %1452 = vrot.lane.b32.xlu0 %v1449, 124
        %v1453 = vpop.permute.xlu0 %1452
        %1454 = vrot.lane.b32.xlu0 %v1451, 124
        %v1455 = vpop.permute.xlu0 %1454
        %v1458 = vadd.f32 %v1437, %v1453
        %v1459 = vadd.f32 %v1438, %v1455
        %s1460 = sld [smem:[#allocation2 + $0x21]]
        %v1461 = vstv %s1460
        %v1462 = vmul.f32 %v1461, %v192
        %v1463 = vmul.f32 %v1461, %v193
        %v1464 = vmul.f32 %v1461, %v194
        %v1468 = vrot.slane %v1462, 4
        %v1469 = vrot.slane %v1463, 4
        %v1470 = vsel %vm1265, %v1468, %v1469
        %v1471 = vrot.slane %v1464, 4
        %v1472 = vsel %vm1265, %v1469, %v1471
        %1473 = vrot.lane.b32.xlu0 %v1470, 123
        %v1474 = vpop.permute.xlu0 %1473
        %1475 = vrot.lane.b32.xlu0 %v1472, 123
        %v1476 = vpop.permute.xlu0 %1475
        %v1479 = vadd.f32 %v1458, %v1474
        %v1480 = vadd.f32 %v1459, %v1476
        %s1481 = sld [smem:[#allocation2 + $0x52]]
        %v1482 = vstv %s1481
        %v1483 = vmul.f32 %v1482, %v201
        %v1484 = vmul.f32 %v1482, %v208
        %v1485 = vmul.f32 %v1482, %v215
        %v1489 = vrot.slane %v1483, 4
        %v1490 = vrot.slane %v1484, 4
        %v1491 = vsel %vm1265, %v1489, %v1490
        %v1492 = vrot.slane %v1485, 4
        %v1493 = vsel %vm1265, %v1490, %v1492
        %1494 = vrot.lane.b32.xlu0 %v1491, 123
        %v1495 = vpop.permute.xlu0 %1494
        %1496 = vrot.lane.b32.xlu0 %v1493, 123
        %v1497 = vpop.permute.xlu0 %1496
        %v1500 = vadd.f32 %v1479, %v1495
        %v1501 = vadd.f32 %v1480, %v1497
        %s1502 = sld [smem:[#allocation2 + $0x22]]
        %v1503 = vstv %s1502
        %v1504 = vmul.f32 %v1503, %v192
        %v1505 = vmul.f32 %v1503, %v193
        %v1506 = vmul.f32 %v1503, %v194
        %v1510 = vrot.slane %v1504, 4
        %v1511 = vrot.slane %v1505, 4
        %v1512 = vsel %vm1265, %v1510, %v1511
        %v1513 = vrot.slane %v1506, 4
        %v1514 = vsel %vm1265, %v1511, %v1513
        %1515 = vrot.lane.b32.xlu0 %v1512, 122
        %v1516 = vpop.permute.xlu0 %1515
        %1517 = vrot.lane.b32.xlu0 %v1514, 122
        %v1518 = vpop.permute.xlu0 %1517
        %v1521 = vadd.f32 %v1500, %v1516
        %v1522 = vadd.f32 %v1501, %v1518
        %s1523 = sld [smem:[#allocation2 + $0x53]]
        %v1524 = vstv %s1523
        %v1525 = vmul.f32 %v1524, %v201
        %v1526 = vmul.f32 %v1524, %v208
        %v1527 = vmul.f32 %v1524, %v215
        %v1531 = vrot.slane %v1525, 4
        %v1532 = vrot.slane %v1526, 4
        %v1533 = vsel %vm1265, %v1531, %v1532
        %v1534 = vrot.slane %v1527, 4
        %v1535 = vsel %vm1265, %v1532, %v1534
        %1536 = vrot.lane.b32.xlu0 %v1533, 122
        %v1537 = vpop.permute.xlu0 %1536
        %1538 = vrot.lane.b32.xlu0 %v1535, 122
        %v1539 = vpop.permute.xlu0 %1538
        %v1542 = vadd.f32 %v1521, %v1537
        %v1543 = vadd.f32 %v1522, %v1539
        %s1544 = sld [smem:[#allocation2 + $0x23]]
        %v1545 = vstv %s1544
        %v1546 = vmul.f32 %v1545, %v192
        %v1547 = vmul.f32 %v1545, %v193
        %v1548 = vmul.f32 %v1545, %v194
        %vm1552 = vcmask 1042432
        %v1553 = vrot.slane %v1546, 5
        %v1554 = vrot.slane %v1547, 5
        %v1555 = vsel %vm1552, %v1553, %v1554
        %v1556 = vrot.slane %v1548, 5
        %v1557 = vsel %vm1552, %v1554, %v1556
        %v1560 = vadd.f32 %v1542, %v1555
        %v1561 = vadd.f32 %v1543, %v1557
        %s1562 = sld [smem:[#allocation2 + $0x54]]
        %v1563 = vstv %s1562
        %v1564 = vmul.f32 %v1563, %v201
        %v1565 = vmul.f32 %v1563, %v208
        %v1566 = vmul.f32 %v1563, %v215
        %v1570 = vrot.slane %v1564, 5
        %v1571 = vrot.slane %v1565, 5
        %v1572 = vsel %vm1552, %v1570, %v1571
        %v1573 = vrot.slane %v1566, 5
        %v1574 = vsel %vm1552, %v1571, %v1573
        %v1577 = vadd.f32 %v1560, %v1572
        %v1578 = vadd.f32 %v1561, %v1574
        %s1579 = sld [smem:[#allocation2 + $0x24]]
        %v1580 = vstv %s1579
        %v1581 = vmul.f32 %v1580, %v192
        %v1582 = vmul.f32 %v1580, %v193
        %v1583 = vmul.f32 %v1580, %v194
        %v1587 = vrot.slane %v1581, 5
        %v1588 = vrot.slane %v1582, 5
        %v1589 = vsel %vm1552, %v1587, %v1588
        %v1590 = vrot.slane %v1583, 5
        %v1591 = vsel %vm1552, %v1588, %v1590
        %1592 = vrot.lane.b32.xlu0 %v1589, 127
        %v1593 = vpop.permute.xlu0 %1592
        %1594 = vrot.lane.b32.xlu0 %v1591, 127
        %v1595 = vpop.permute.xlu0 %1594
        %v1598 = vadd.f32 %v1577, %v1593
        %v1599 = vadd.f32 %v1578, %v1595
        %s1600 = sld [smem:[#allocation2 + $0x55]]
        %v1601 = vstv %s1600
        %v1602 = vmul.f32 %v1601, %v201
        %v1603 = vmul.f32 %v1601, %v208
        %v1604 = vmul.f32 %v1601, %v215
        %v1608 = vrot.slane %v1602, 5
        %v1609 = vrot.slane %v1603, 5
        %v1610 = vsel %vm1552, %v1608, %v1609
        %v1611 = vrot.slane %v1604, 5
        %v1612 = vsel %vm1552, %v1609, %v1611
        %1613 = vrot.lane.b32.xlu0 %v1610, 127
        %v1614 = vpop.permute.xlu0 %1613
        %1615 = vrot.lane.b32.xlu0 %v1612, 127
        %v1616 = vpop.permute.xlu0 %1615
        %v1619 = vadd.f32 %v1598, %v1614
        %v1620 = vadd.f32 %v1599, %v1616
        %s1621 = sld [smem:[#allocation2 + $0x25]]
        %v1622 = vstv %s1621
        %v1623 = vmul.f32 %v1622, %v192
        %v1624 = vmul.f32 %v1622, %v193
        %v1625 = vmul.f32 %v1622, %v194
        %v1629 = vrot.slane %v1623, 5
        %v1630 = vrot.slane %v1624, 5
        %v1631 = vsel %vm1552, %v1629, %v1630
        %v1632 = vrot.slane %v1625, 5
        %v1633 = vsel %vm1552, %v1630, %v1632
        %1634 = vrot.lane.b32.xlu0 %v1631, 126
        %v1635 = vpop.permute.xlu0 %1634
        %1636 = vrot.lane.b32.xlu0 %v1633, 126
        %v1637 = vpop.permute.xlu0 %1636
        %v1640 = vadd.f32 %v1619, %v1635
        %v1641 = vadd.f32 %v1620, %v1637
        %s1642 = sld [smem:[#allocation2 + $0x56]]
        %v1643 = vstv %s1642
        %v1644 = vmul.f32 %v1643, %v201
        %v1645 = vmul.f32 %v1643, %v208
        %v1646 = vmul.f32 %v1643, %v215
        %v1650 = vrot.slane %v1644, 5
        %v1651 = vrot.slane %v1645, 5
        %v1652 = vsel %vm1552, %v1650, %v1651
        %v1653 = vrot.slane %v1646, 5
        %v1654 = vsel %vm1552, %v1651, %v1653
        %1655 = vrot.lane.b32.xlu0 %v1652, 126
        %v1656 = vpop.permute.xlu0 %1655
        %1657 = vrot.lane.b32.xlu0 %v1654, 126
        %v1658 = vpop.permute.xlu0 %1657
        %v1661 = vadd.f32 %v1640, %v1656
        %v1662 = vadd.f32 %v1641, %v1658
        %s1663 = sld [smem:[#allocation2 + $0x26]]
        %v1664 = vstv %s1663
        %v1665 = vmul.f32 %v1664, %v192
        %v1666 = vmul.f32 %v1664, %v193
        %v1667 = vmul.f32 %v1664, %v194
        %v1671 = vrot.slane %v1665, 5
        %v1672 = vrot.slane %v1666, 5
        %v1673 = vsel %vm1552, %v1671, %v1672
        %v1674 = vrot.slane %v1667, 5
        %v1675 = vsel %vm1552, %v1672, %v1674
        %1676 = vrot.lane.b32.xlu0 %v1673, 125
        %v1677 = vpop.permute.xlu0 %1676
        %1678 = vrot.lane.b32.xlu0 %v1675, 125
        %v1679 = vpop.permute.xlu0 %1678
        %v1682 = vadd.f32 %v1661, %v1677
        %v1683 = vadd.f32 %v1662, %v1679
        %s1684 = sld [smem:[#allocation2 + $0x57]]
        %v1685 = vstv %s1684
        %v1686 = vmul.f32 %v1685, %v201
        %v1687 = vmul.f32 %v1685, %v208
        %v1688 = vmul.f32 %v1685, %v215
        %v1692 = vrot.slane %v1686, 5
        %v1693 = vrot.slane %v1687, 5
        %v1694 = vsel %vm1552, %v1692, %v1693
        %v1695 = vrot.slane %v1688, 5
        %v1696 = vsel %vm1552, %v1693, %v1695
        %1697 = vrot.lane.b32.xlu0 %v1694, 125
        %v1698 = vpop.permute.xlu0 %1697
        %1699 = vrot.lane.b32.xlu0 %v1696, 125
        %v1700 = vpop.permute.xlu0 %1699
        %v1703 = vadd.f32 %v1682, %v1698
        %v1704 = vadd.f32 %v1683, %v1700
        %s1705 = sld [smem:[#allocation2 + $0x27]]
        %v1706 = vstv %s1705
        %v1707 = vmul.f32 %v1706, %v192
        %v1708 = vmul.f32 %v1706, %v193
        %v1709 = vmul.f32 %v1706, %v194
        %v1713 = vrot.slane %v1707, 5
        %v1714 = vrot.slane %v1708, 5
        %v1715 = vsel %vm1552, %v1713, %v1714
        %v1716 = vrot.slane %v1709, 5
        %v1717 = vsel %vm1552, %v1714, %v1716
        %1718 = vrot.lane.b32.xlu0 %v1715, 124
        %v1719 = vpop.permute.xlu0 %1718
        %1720 = vrot.lane.b32.xlu0 %v1717, 124
        %v1721 = vpop.permute.xlu0 %1720
        %v1724 = vadd.f32 %v1703, %v1719
        %v1725 = vadd.f32 %v1704, %v1721
        %s1726 = sld [smem:[#allocation2 + $0x58]]
        %v1727 = vstv %s1726
        %v1728 = vmul.f32 %v1727, %v201
        %v1729 = vmul.f32 %v1727, %v208
        %v1730 = vmul.f32 %v1727, %v215
        %v1734 = vrot.slane %v1728, 5
        %v1735 = vrot.slane %v1729, 5
        %v1736 = vsel %vm1552, %v1734, %v1735
        %v1737 = vrot.slane %v1730, 5
        %v1738 = vsel %vm1552, %v1735, %v1737
        %1739 = vrot.lane.b32.xlu0 %v1736, 124
        %v1740 = vpop.permute.xlu0 %1739
        %1741 = vrot.lane.b32.xlu0 %v1738, 124
        %v1742 = vpop.permute.xlu0 %1741
        %v1745 = vadd.f32 %v1724, %v1740
        %v1746 = vadd.f32 %v1725, %v1742
        %s1747 = sld [smem:[#allocation2 + $0x28]]
        %v1748 = vstv %s1747
        %v1749 = vmul.f32 %v1748, %v192
        %v1750 = vmul.f32 %v1748, %v193
        %v1751 = vmul.f32 %v1748, %v194
        %v1755 = vrot.slane %v1749, 5
        %v1756 = vrot.slane %v1750, 5
        %v1757 = vsel %vm1552, %v1755, %v1756
        %v1758 = vrot.slane %v1751, 5
        %v1759 = vsel %vm1552, %v1756, %v1758
        %1760 = vrot.lane.b32.xlu0 %v1757, 123
        %v1761 = vpop.permute.xlu0 %1760
        %1762 = vrot.lane.b32.xlu0 %v1759, 123
        %v1763 = vpop.permute.xlu0 %1762
        %v1766 = vadd.f32 %v1745, %v1761
        %v1767 = vadd.f32 %v1746, %v1763
        %s1768 = sld [smem:[#allocation2 + $0x59]]
        %v1769 = vstv %s1768
        %v1770 = vmul.f32 %v1769, %v201
        %v1771 = vmul.f32 %v1769, %v208
        %v1772 = vmul.f32 %v1769, %v215
        %v1776 = vrot.slane %v1770, 5
        %v1777 = vrot.slane %v1771, 5
        %v1778 = vsel %vm1552, %v1776, %v1777
        %v1779 = vrot.slane %v1772, 5
        %v1780 = vsel %vm1552, %v1777, %v1779
        %1781 = vrot.lane.b32.xlu0 %v1778, 123
        %v1782 = vpop.permute.xlu0 %1781
        %1783 = vrot.lane.b32.xlu0 %v1780, 123
        %v1784 = vpop.permute.xlu0 %1783
        %v1787 = vadd.f32 %v1766, %v1782
        %v1788 = vadd.f32 %v1767, %v1784
        %s1789 = sld [smem:[#allocation2 + $0x29]]
        %v1790 = vstv %s1789
        %v1791 = vmul.f32 %v1790, %v192
        %v1792 = vmul.f32 %v1790, %v193
        %v1793 = vmul.f32 %v1790, %v194
        %v1797 = vrot.slane %v1791, 5
        %v1798 = vrot.slane %v1792, 5
        %v1799 = vsel %vm1552, %v1797, %v1798
        %v1800 = vrot.slane %v1793, 5
        %v1801 = vsel %vm1552, %v1798, %v1800
        %1802 = vrot.lane.b32.xlu0 %v1799, 122
        %v1803 = vpop.permute.xlu0 %1802
        %1804 = vrot.lane.b32.xlu0 %v1801, 122
        %v1805 = vpop.permute.xlu0 %1804
        %v1808 = vadd.f32 %v1787, %v1803
        %v1809 = vadd.f32 %v1788, %v1805
        %s1810 = sld [smem:[#allocation2 + $0x5a]]
        %v1811 = vstv %s1810
        %v1812 = vmul.f32 %v1811, %v201
        %v1813 = vmul.f32 %v1811, %v208
        %v1814 = vmul.f32 %v1811, %v215
        %v1818 = vrot.slane %v1812, 5
        %v1819 = vrot.slane %v1813, 5
        %v1820 = vsel %vm1552, %v1818, %v1819
        %v1821 = vrot.slane %v1814, 5
        %v1822 = vsel %vm1552, %v1819, %v1821
        %1823 = vrot.lane.b32.xlu0 %v1820, 122
        %v1824 = vpop.permute.xlu0 %1823
        %1825 = vrot.lane.b32.xlu0 %v1822, 122
        %v1826 = vpop.permute.xlu0 %1825
        %v1829 = vadd.f32 %v1808, %v1824
        %v1830 = vadd.f32 %v1809, %v1826
        %s1831 = sld [smem:[#allocation2 + $0x2a]]
        %v1832 = vstv %s1831
        %v1833 = vmul.f32 %v1832, %v192
        %v1834 = vmul.f32 %v1832, %v193
        %v1835 = vmul.f32 %v1832, %v194
        %vm1839 = vcmask 1041408
        %v1840 = vrot.slane %v1833, 6
        %v1841 = vrot.slane %v1834, 6
        %v1842 = vsel %vm1839, %v1840, %v1841
        %v1843 = vrot.slane %v1835, 6
        %v1844 = vsel %vm1839, %v1841, %v1843
        %v1847 = vadd.f32 %v1829, %v1842
        %v1848 = vadd.f32 %v1830, %v1844
        %s1849 = sld [smem:[#allocation2 + $0x5b]]
        %v1850 = vstv %s1849
        %v1851 = vmul.f32 %v1850, %v201
        %v1852 = vmul.f32 %v1850, %v208
        %v1853 = vmul.f32 %v1850, %v215
        %v1857 = vrot.slane %v1851, 6
        %v1858 = vrot.slane %v1852, 6
        %v1859 = vsel %vm1839, %v1857, %v1858
        %v1860 = vrot.slane %v1853, 6
        %v1861 = vsel %vm1839, %v1858, %v1860
        %v1864 = vadd.f32 %v1847, %v1859
        %v1865 = vadd.f32 %v1848, %v1861
        %s1866 = sld [smem:[#allocation2 + $0x2b]]
        %v1867 = vstv %s1866
        %v1868 = vmul.f32 %v1867, %v192
        %v1869 = vmul.f32 %v1867, %v193
        %v1870 = vmul.f32 %v1867, %v194
        %v1874 = vrot.slane %v1868, 6
        %v1875 = vrot.slane %v1869, 6
        %v1876 = vsel %vm1839, %v1874, %v1875
        %v1877 = vrot.slane %v1870, 6
        %v1878 = vsel %vm1839, %v1875, %v1877
        %1879 = vrot.lane.b32.xlu0 %v1876, 127
        %v1880 = vpop.permute.xlu0 %1879
        %1881 = vrot.lane.b32.xlu0 %v1878, 127
        %v1882 = vpop.permute.xlu0 %1881
        %v1885 = vadd.f32 %v1864, %v1880
        %v1886 = vadd.f32 %v1865, %v1882
        %s1887 = sld [smem:[#allocation2 + $0x5c]]
        %v1888 = vstv %s1887
        %v1889 = vmul.f32 %v1888, %v201
        %v1890 = vmul.f32 %v1888, %v208
        %v1891 = vmul.f32 %v1888, %v215
        %v1895 = vrot.slane %v1889, 6
        %v1896 = vrot.slane %v1890, 6
        %v1897 = vsel %vm1839, %v1895, %v1896
        %v1898 = vrot.slane %v1891, 6
        %v1899 = vsel %vm1839, %v1896, %v1898
        %1900 = vrot.lane.b32.xlu0 %v1897, 127
        %v1901 = vpop.permute.xlu0 %1900
        %1902 = vrot.lane.b32.xlu0 %v1899, 127
        %v1903 = vpop.permute.xlu0 %1902
        %v1906 = vadd.f32 %v1885, %v1901
        %v1907 = vadd.f32 %v1886, %v1903
        %s1908 = sld [smem:[#allocation2 + $0x2c]]
        %v1909 = vstv %s1908
        %v1910 = vmul.f32 %v1909, %v192
        %v1911 = vmul.f32 %v1909, %v193
        %v1912 = vmul.f32 %v1909, %v194
        %v1916 = vrot.slane %v1910, 6
        %v1917 = vrot.slane %v1911, 6
        %v1918 = vsel %vm1839, %v1916, %v1917
        %v1919 = vrot.slane %v1912, 6
        %v1920 = vsel %vm1839, %v1917, %v1919
        %1921 = vrot.lane.b32.xlu0 %v1918, 126
        %v1922 = vpop.permute.xlu0 %1921
        %1923 = vrot.lane.b32.xlu0 %v1920, 126
        %v1924 = vpop.permute.xlu0 %1923
        %v1927 = vadd.f32 %v1906, %v1922
        %v1928 = vadd.f32 %v1907, %v1924
        %s1929 = sld [smem:[#allocation2 + $0x5d]]
        %v1930 = vstv %s1929
        %v1931 = vmul.f32 %v1930, %v201
        %v1932 = vmul.f32 %v1930, %v208
        %v1933 = vmul.f32 %v1930, %v215
        %v1937 = vrot.slane %v1931, 6
        %v1938 = vrot.slane %v1932, 6
        %v1939 = vsel %vm1839, %v1937, %v1938
        %v1940 = vrot.slane %v1933, 6
        %v1941 = vsel %vm1839, %v1938, %v1940
        %1942 = vrot.lane.b32.xlu0 %v1939, 126
        %v1943 = vpop.permute.xlu0 %1942
        %1944 = vrot.lane.b32.xlu0 %v1941, 126
        %v1945 = vpop.permute.xlu0 %1944
        %v1948 = vadd.f32 %v1927, %v1943
        %v1949 = vadd.f32 %v1928, %v1945
        %s1950 = sld [smem:[#allocation2 + $0x2d]]
        %v1951 = vstv %s1950
        %v1952 = vmul.f32 %v1951, %v192
        %v1953 = vmul.f32 %v1951, %v193
        %v1954 = vmul.f32 %v1951, %v194
        %v1958 = vrot.slane %v1952, 6
        %v1959 = vrot.slane %v1953, 6
        %v1960 = vsel %vm1839, %v1958, %v1959
        %v1961 = vrot.slane %v1954, 6
        %v1962 = vsel %vm1839, %v1959, %v1961
        %1963 = vrot.lane.b32.xlu0 %v1960, 125
        %v1964 = vpop.permute.xlu0 %1963
        %1965 = vrot.lane.b32.xlu0 %v1962, 125
        %v1966 = vpop.permute.xlu0 %1965
        %v1969 = vadd.f32 %v1948, %v1964
        %v1970 = vadd.f32 %v1949, %v1966
        %s1971 = sld [smem:[#allocation2 + $0x5e]]
        %v1972 = vstv %s1971
        %v1973 = vmul.f32 %v1972, %v201
        %v1974 = vmul.f32 %v1972, %v208
        %v1975 = vmul.f32 %v1972, %v215
        %v1979 = vrot.slane %v1973, 6
        %v1980 = vrot.slane %v1974, 6
        %v1981 = vsel %vm1839, %v1979, %v1980
        %v1982 = vrot.slane %v1975, 6
        %v1983 = vsel %vm1839, %v1980, %v1982
        %1984 = vrot.lane.b32.xlu0 %v1981, 125
        %v1985 = vpop.permute.xlu0 %1984
        %1986 = vrot.lane.b32.xlu0 %v1983, 125
        %v1987 = vpop.permute.xlu0 %1986
        %v1990 = vadd.f32 %v1969, %v1985
        %v1991 = vadd.f32 %v1970, %v1987
        %s1992 = sld [smem:[#allocation2 + $0x2e]]
        %v1993 = vstv %s1992
        %v1994 = vmul.f32 %v1993, %v192
        %v1995 = vmul.f32 %v1993, %v193
        %v1996 = vmul.f32 %v1993, %v194
        %v2000 = vrot.slane %v1994, 6
        %v2001 = vrot.slane %v1995, 6
        %v2002 = vsel %vm1839, %v2000, %v2001
        %v2003 = vrot.slane %v1996, 6
        %v2004 = vsel %vm1839, %v2001, %v2003
        %2005 = vrot.lane.b32.xlu0 %v2002, 124
        %v2006 = vpop.permute.xlu0 %2005
        %2007 = vrot.lane.b32.xlu0 %v2004, 124
        %v2008 = vpop.permute.xlu0 %2007
        %v2011 = vadd.f32 %v1990, %v2006
        %v2012 = vadd.f32 %v1991, %v2008
        %s2013 = sld [smem:[#allocation2 + $0x5f]]
        %v2014 = vstv %s2013
        %v2015 = vmul.f32 %v2014, %v201
        %v2016 = vmul.f32 %v2014, %v208
        %v2017 = vmul.f32 %v2014, %v215
        %v2021 = vrot.slane %v2015, 6
        %v2022 = vrot.slane %v2016, 6
        %v2023 = vsel %vm1839, %v2021, %v2022
        %v2024 = vrot.slane %v2017, 6
        %v2025 = vsel %vm1839, %v2022, %v2024
        %2026 = vrot.lane.b32.xlu0 %v2023, 124
        %v2027 = vpop.permute.xlu0 %2026
        %2028 = vrot.lane.b32.xlu0 %v2025, 124
        %v2029 = vpop.permute.xlu0 %2028
        %v2032 = vadd.f32 %v2011, %v2027
        %v2033 = vadd.f32 %v2012, %v2029
        %s2034 = sld [smem:[#allocation2 + $0x2f]]
        %v2035 = vstv %s2034
        %v2036 = vmul.f32 %v2035, %v192
        %v2037 = vmul.f32 %v2035, %v193
        %v2038 = vmul.f32 %v2035, %v194
        %v2042 = vrot.slane %v2036, 6
        %v2043 = vrot.slane %v2037, 6
        %v2044 = vsel %vm1839, %v2042, %v2043
        %v2045 = vrot.slane %v2038, 6
        %v2046 = vsel %vm1839, %v2043, %v2045
        %2047 = vrot.lane.b32.xlu0 %v2044, 123
        %v2048 = vpop.permute.xlu0 %2047
        %2049 = vrot.lane.b32.xlu0 %v2046, 123
        %v2050 = vpop.permute.xlu0 %2049
        %v2053 = vadd.f32 %v2032, %v2048
        %v2054 = vadd.f32 %v2033, %v2050
        %s2055 = sld [smem:[#allocation2 + $0x60]]
        %v2056 = vstv %s2055
        %v2057 = vmul.f32 %v2056, %v201
        %v2058 = vmul.f32 %v2056, %v208
        %v2059 = vmul.f32 %v2056, %v215
        %v2063 = vrot.slane %v2057, 6
        %v2064 = vrot.slane %v2058, 6
        %v2065 = vsel %vm1839, %v2063, %v2064
        %v2066 = vrot.slane %v2059, 6
        %v2067 = vsel %vm1839, %v2064, %v2066
        %2068 = vrot.lane.b32.xlu0 %v2065, 123
        %v2069 = vpop.permute.xlu0 %2068
        %2070 = vrot.lane.b32.xlu0 %v2067, 123
        %v2071 = vpop.permute.xlu0 %2070
        %v2074 = vadd.f32 %v2053, %v2069
        %v2075 = vadd.f32 %v2054, %v2071
        %s2076 = sld [smem:[#allocation2 + $0x30]]
        %v2077 = vstv %s2076
        %v2078 = vmul.f32 %v2077, %v192
        %v2079 = vmul.f32 %v2077, %v193
        %v2080 = vmul.f32 %v2077, %v194
        %v2084 = vrot.slane %v2078, 6
        %v2085 = vrot.slane %v2079, 6
        %v2086 = vsel %vm1839, %v2084, %v2085
        %v2087 = vrot.slane %v2080, 6
        %v2088 = vsel %vm1839, %v2085, %v2087
        %2089 = vrot.lane.b32.xlu0 %v2086, 122
        %v2090 = vpop.permute.xlu0 %2089
        %2091 = vrot.lane.b32.xlu0 %v2088, 122
        %v2092 = vpop.permute.xlu0 %2091
        %v2095 = vadd.f32 %v2074, %v2090
        %v2096 = vadd.f32 %v2075, %v2092
        %s2097 = sld [smem:[#allocation2 + $0x61]]
        %v2098 = vstv %s2097
        %v2099 = vmul.f32 %v2098, %v201
        %v2100 = vmul.f32 %v2098, %v208
        %v2101 = vmul.f32 %v2098, %v215
        %v2105 = vrot.slane %v2099, 6
        %v2106 = vrot.slane %v2100, 6
        %v2107 = vsel %vm1839, %v2105, %v2106
        %v2108 = vrot.slane %v2101, 6
        %v2109 = vsel %vm1839, %v2106, %v2108
        %2110 = vrot.lane.b32.xlu0 %v2107, 122
        %v2111 = vpop.permute.xlu0 %2110
        %2112 = vrot.lane.b32.xlu0 %v2109, 122
        %v2113 = vpop.permute.xlu0 %2112
        %v2116 = vadd.f32 %v2095, %v2111
        %v2117 = vadd.f32 %v2096, %v2113
        %v2118 = vsub.f32 0.0, %v2116
        %v2119 = vsub.f32 0.0, %v2117
        %v2120 = vmul.f32 %v2118, 1.442695
        %v2121 = vpow.pop %v2120
        %v2122 = vmul.f32 %v2119, 1.442695
        %v2123 = vpow.pop %v2122
        %v2124 = vadd.f32 %v2121, 1.0
        %v2125 = vadd.f32 %v2123, 1.0
        %v2126 = vrcp.pop %v2124
        %v2127 = vmul.f32 1.0, %v2126
        %v2128 = vrcp.pop %v2125
        %v2129 = vmul.f32 1.0, %v2128
        %vm2130 = vcmask 130048
        %2131 = vst.msk [vmem:[%s150] sm:$0xff] %vm2130, %v2127
        %2132 = vst.msk [vmem:[%s150 + $0x8] sm:$0xff] %vm2130, %v2129
        %s2133 = sand.u32 %s72, 1
        %s2134 = scalar_lea.sflag [#allocation3], %s2133
        %s2135 = sand.u32 %s72, 1
        %s2136 = smul.addr %s2135, 16
        %s2137 = scalar_lea.vmem [#allocation5], %s2136
        // Predicated region
        $region33: #{_lambda_.1} parent=27 // pred_check
          %p2138 = pneg %p82
        $region34: #{_lambda_.1} parent=27 // pred_check_branch
          %2140 = sbr.rel (%p2138) target = $region36
        $region35: #{_lambda_.1} parent=27 // pred_region
          %s2142 = ssub.s32 256, 256
          %2143 = vsyncadd %s2134, %s2142
          %s2144 = smul.addr %s17, 2
          %s2145 = smul.addr %s2144, 128
          %s2146 = scalar_lea.hbm %s2, %s2145
          %s2147 = sshll.u32 %s2137, 4
          %s2148 = int_to_ptr.vmem [resolvable:$true] %s2147
          %2153 = dma.vmem_to_hbm [thread:$0]  %s2148, 256, %s2146, %s2134, 128, 128, 8
        $region36: #{_lambda_.1} parent=27 // pred_fallthru
          _
      $region28: #{_lambda_.1} parent=5 // pred_fallthru
        _
      %p2154 = scmp.le.s32.totalorder 2, %s12
      // Predicated region
      $region37: #{_lambda_.1} parent=5 // pred_check
        %p2155 = pneg %p2154
      $region38: #{_lambda_.1} parent=5 // pred_check_branch
        %2157 = sbr.rel (%p2155) target = $region40
      $region39: #{_lambda_.1} parent=5 // pred_region
        %s2158 = ssub.s32 %s12, 2
        // Predicated region
        $region41: #{_lambda_.1} parent=39 // pred_check
          %p2159 = pneg %p88
        $region42: #{_lambda_.1} parent=39 // pred_check_branch
          %2161 = sbr.rel (%p2159) target = $region44
        $region43: #{_lambda_.1} parent=39 // pred_region
          %s2162 = sand.u32 %s73, 1
          %s2163 = scalar_lea.sflag [#allocation3], %s2162
          %s2164 = sand.u32 %s73, 1
          %s2165 = smul.addr %s2164, 16
          %s2166 = scalar_lea.vmem [#allocation5], %s2165
          %2167 = dma.done %s2163, 256
        $region44: #{_lambda_.1} parent=39 // pred_fallthru
          _
      $region40: #{_lambda_.1} parent=5 // pred_fallthru
        _
    $region6: #{_lambda_.1} parent=1 // loop_footer
      %s16 = sadd.s32 1, %s12
    $region7: #{_lambda_.1} parent=1 // loop_footer_branch
      %11 = sbr.rel target = $region3
    $region8: #{_lambda_.1} parent=1 // loop_exit
      _
    %2168 = vsyncpa [#allocation3], 1
    %s2169 = scalar_lea.sflag [#allocation3], 1
    %2170 = vsyncpa %s2169, 1
    %2171 = vsyncpa [#allocation4], 1
    %s2172 = scalar_lea.sflag [#allocation4], 1
    %2173 = vsyncpa %s2172, 1

</llo_original>
